<compile_context>
chip_gen: v7x
topology: tpu7x:2x2x1
jax: 0.10.0
libtpu: 0.0.40
codegen_flags: <defaults>
</compile_context>

<pallas_src>
import functools
import jax
import jax.numpy as jnp
from jax.experimental import pallas as pl
from jax.experimental.pallas import tpu as pltpu


def rnn_fw_seq_kernel(n_layers,
                      y_ref, xhat0_ref, hn0_ref,
                      Ft_ref, W1x_ref, W1y_ref, b1_ref,
                      WihT_ref, WhhT_ref, bih_ref, bhh_ref,
                      W2T_ref, b2_ref,
                      xhat_ref, hn_out_ref,
                      xprev_scr, hn_scr):
    t = pl.program_id(0)

    # ---- init recurrent state from the provided initial conditions ----
    @pl.when(t == 0)
    def _init():
        xprev_scr[...] = xhat0_ref[...]          # (1, m)
        hn_scr[...] = hn0_ref[...]               # (L, 1, H)

    x_prev = xprev_scr[...]                      # (1, m)
    y = y_ref[0]                                 # (1, n)

    # ---- FC1 + ReLU (W1 pre-split & pre-transposed: no concat, no .T) ----
    pre1 = (jnp.dot(x_prev, W1x_ref[...], preferred_element_type=jnp.float32)
            + jnp.dot(y, W1y_ref[...], preferred_element_type=jnp.float32)
            + b1_ref[...])
    x = jnp.maximum(pre1, 0.0)                   # (1, D)

    # ---- stacked GRU, seq_len = 1 (per-gate, lane-aligned matvecs) ----
    for l in range(n_layers):
        h = hn_scr[l]                            # (1, H)
        i_r = jnp.dot(x, WihT_ref[l, 0], preferred_element_type=jnp.float32) + bih_ref[l, 0]
        i_z = jnp.dot(x, WihT_ref[l, 1], preferred_element_type=jnp.float32) + bih_ref[l, 1]
        i_n = jnp.dot(x, WihT_ref[l, 2], preferred_element_type=jnp.float32) + bih_ref[l, 2]
        h_r = jnp.dot(h, WhhT_ref[l, 0], preferred_element_type=jnp.float32) + bhh_ref[l, 0]
        h_z = jnp.dot(h, WhhT_ref[l, 1], preferred_element_type=jnp.float32) + bhh_ref[l, 1]
        h_n = jnp.dot(h, WhhT_ref[l, 2], preferred_element_type=jnp.float32) + bhh_ref[l, 2]
        r = jax.nn.sigmoid(i_r + h_r)
        z = jax.nn.sigmoid(i_z + h_z)
        n_ = jnp.tanh(i_n + r * h_n)
        h_new = (1.0 - z) * n_ + z * h
        hn_scr[l] = h_new
        x = h_new                                # input to next layer

    # ---- FC2 + ReLU ----
    out_fc2 = jnp.maximum(
        jnp.dot(x, W2T_ref[...], preferred_element_type=jnp.float32) + b2_ref[...],
        0.0)                                     # (1, m)

    # ---- step_prior (linear SysModel.f) and posterior combine ----
    m1x_prior = jnp.dot(x_prev, Ft_ref[...], preferred_element_type=jnp.float32)
    xhat = m1x_prior + out_fc2                   # (1, m)

    xhat_ref[t] = xhat                           # resident trajectory output
    xprev_scr[...] = xhat                        # feedback for next step

    @pl.when(t == pl.num_programs(0) - 1)
    def _finalize():
        hn_out_ref[...] = hn_scr[...]


def _prepare_weights(params, *, n_layers, hidden_dim, m, n):
    """Host-side one-time relayout: (out,in) torch weights -> (in,out), per-gate GRU."""
    H = hidden_dim
    W1 = jnp.asarray(params["W1"], jnp.float32)          # (D, m+n)
    D = W1.shape[0]
    Ft = jnp.asarray(params["F"], jnp.float32).T          # (m, m)
    W1x = W1[:, :m].T                                     # (m, D)
    W1y = W1[:, m:].T                                     # (n, D)
    b1 = jnp.asarray(params["b1"], jnp.float32).reshape(1, D)
    Wih = jnp.asarray(params["Wih"], jnp.float32)         # (L, 3H, D)
    Whh = jnp.asarray(params["Whh"], jnp.float32)         # (L, 3H, H)
    WihT = jnp.transpose(Wih.reshape(n_layers, 3, H, D), (0, 1, 3, 2))  # (L,3,D,H)
    WhhT = jnp.transpose(Whh.reshape(n_layers, 3, H, H), (0, 1, 3, 2))  # (L,3,H,H)
    bih = jnp.asarray(params["bih"], jnp.float32).reshape(n_layers, 3, 1, H)
    bhh = jnp.asarray(params["bhh"], jnp.float32).reshape(n_layers, 3, 1, H)
    W2T = jnp.asarray(params["W2"], jnp.float32).T        # (H, m)
    b2 = jnp.asarray(params["b2"], jnp.float32).reshape(1, m)
    return Ft, W1x, W1y, b1, WihT, WhhT, bih, bhh, W2T, b2


def rnn_fw_forward_sequence(xhat0, y_seq, hn0, params, *, n_layers, hidden_dim, m, n):
    """Run T FW_RNN_steps in a single fused pallas_call.

    Returns (xhat_trajectory (T, m), hn_final (n_layers, 1, hidden_dim))."""
    H = hidden_dim
    T = y_seq.shape[0]
    Ft, W1x, W1y, b1, WihT, WhhT, bih, bhh, W2T, b2 = _prepare_weights(
        params, n_layers=n_layers, hidden_dim=hidden_dim, m=m, n=n)

    y3 = jnp.asarray(y_seq, jnp.float32).reshape(T, 1, n)
    x0 = jnp.asarray(xhat0, jnp.float32).reshape(1, m)
    h0 = jnp.asarray(hn0, jnp.float32).reshape(n_layers, 1, H)

    def resident(shape):
        nd = len(shape)
        return pl.BlockSpec(shape, lambda t, _nd=nd: (0,) * _nd)

    grid_spec = pltpu.PrefetchScalarGridSpec(
        num_scalar_prefetch=0,
        grid=(T,),
        in_specs=[
            pl.BlockSpec((1, 1, n), lambda t: (t, 0, 0)),   # y[t], streamed per step
            resident(x0.shape),                             # initial xhat
            resident(h0.shape),                             # initial hn
            resident(Ft.shape), resident(W1x.shape), resident(W1y.shape),
            resident(b1.shape),
            resident(WihT.shape), resident(WhhT.shape),
            resident(bih.shape), resident(bhh.shape),
            resident(W2T.shape), resident(b2.shape),
        ],
        out_specs=(
            pl.BlockSpec((T, 1, m), lambda t: (0, 0, 0)),          # resident trajectory
            pl.BlockSpec((n_layers, 1, H), lambda t: (0, 0, 0)),   # final hn
        ),
        scratch_shapes=[
            pltpu.VMEM((1, m), jnp.float32),                 # xhat_prev carry
            pltpu.VMEM((n_layers, 1, H), jnp.float32),       # hn carry
        ],
    )

    xhat_seq, hn_new = pl.pallas_call(
        functools.partial(rnn_fw_seq_kernel, n_layers),
        grid_spec=grid_spec,
        out_shape=(
            jax.ShapeDtypeStruct((T, 1, m), jnp.float32),
            jax.ShapeDtypeStruct((n_layers, 1, H), jnp.float32),
        ),
        compiler_params=pltpu.CompilerParams(dimension_semantics=("arbitrary",)),
    )(y3, x0, h0, Ft, W1x, W1y, b1, WihT, WhhT, bih, bhh, W2T, b2)
    return xhat_seq.reshape(T, m), hn_new


def rnn_fw_step(xhat_prev, y, hn, params, **kw):
    """Single FW_RNN_step (== module.forward(y)); just the T=1 fused call."""
    xhat_seq, hn_new = rnn_fw_forward_sequence(
        xhat_prev, jnp.reshape(jnp.asarray(y, jnp.float32), (1, -1)), hn, params, **kw)
    return xhat_seq[0], hn_new


# ---------------------------- pure-JAX reference ----------------------------
def rnn_fw_reference_sequence(xhat0, y_seq, hn0, params, *, n_layers, hidden_dim):
    H = hidden_dim
    x_prev = jnp.asarray(xhat0, jnp.float32).reshape(1, -1)
    hn = jnp.asarray(hn0, jnp.float32)
    xs = []
    for t in range(y_seq.shape[0]):
        yv = y_seq[t].reshape(1, -1)
        in_fc1 = jnp.concatenate([x_prev, yv], axis=1)
        x = jax.nn.relu(in_fc1 @ params["W1"].T + params["b1"])
        hn_new = []
        for l in range(n_layers):
            h = hn[l]
            gi = x @ params["Wih"][l].T + params["bih"][l]
            gh = h @ params["Whh"][l].T + params["bhh"][l]
            r = jax.nn.sigmoid(gi[:, :H] + gh[:, :H])
            z = jax.nn.sigmoid(gi[:, H:2 * H] + gh[:, H:2 * H])
            n_ = jnp.tanh(gi[:, 2 * H:] + r * gh[:, 2 * H:])
            h_new = (1.0 - z) * n_ + z * h
            hn_new.append(h_new)
            x = h_new
        hn = jnp.stack(hn_new)
        out_fc2 = jax.nn.relu(x @ params["W2"].T + params["b2"])
        m1x_prior = x_prev @ params["F"].T
        xhat = m1x_prior + out_fc2
        xs.append(xhat.reshape(-1))
        x_prev = xhat
    return jnp.stack(xs), hn


# ------------------------------- driver -------------------------------------
if __name__ == "__main__":
    # Shapes consistent with Build():
    #   m = 4 (state dim), n = 4 (obs dim), in_mult_RNN = 4, out_mult_RNN = 1, nGRU = 2
    m, n = 4, 4
    in_mult, out_mult, n_layers = 4, 1, 2
    input_dim = (m + n) * in_mult                       # 32
    hidden_dim = (n * n + m * m) * out_mult             # 32
    T = 8                                               # filter trajectory length
    assert input_dim == hidden_dim, "stacked GRU weights require equal in/hidden dims"

    key = jax.random.PRNGKey(0)
    ks = jax.random.split(key, 12)

    def u(k, shape, fan_in):
        s = 1.0 / jnp.sqrt(jnp.float32(fan_in))
        return jax.random.uniform(k, shape, jnp.float32, -s, s)

    params = {
        # SysModel.f as a deterministic linear map (near-identity transition)
        "F": jnp.eye(m, dtype=jnp.float32) + 0.01 * u(ks[0], (m, m), m),
        "W1": u(ks[1], (input_dim, m + n), m + n),
        "b1": u(ks[2], (1, input_dim), m + n),
        "Wih": u(ks[3], (n_layers, 3 * hidden_dim, input_dim), hidden_dim),
        "Whh": u(ks[4], (n_layers, 3 * hidden_dim, hidden_dim), hidden_dim),
        "bih": u(ks[5], (n_layers, 1, 3 * hidden_dim), hidden_dim),
        "bhh": u(ks[6], (n_layers, 1, 3 * hidden_dim), hidden_dim),
        "W2": u(ks[7], (m, hidden_dim), hidden_dim),
        "b2": u(ks[8], (1, m), hidden_dim),
    }

    xhat0 = 0.1 * jnp.ones((m,), jnp.float32)                           # m1x_0
    y_seq = jax.random.normal(ks[9], (T, n), jnp.float32)               # observations
    hn0 = jax.random.normal(ks[10], (n_layers, 1, hidden_dim), jnp.float32)

    # fused T-step kernel
    xhat_seq, hn_new = rnn_fw_forward_sequence(
        xhat0, y_seq, hn0, params,
        n_layers=n_layers, hidden_dim=hidden_dim, m=m, n=n)
    jax.block_until_ready((xhat_seq, hn_new))

    xhat_ref_seq, hn_ref = rnn_fw_reference_sequence(
        xhat0, y_seq, hn0, params, n_layers=n_layers, hidden_dim=hidden_dim)
    assert jnp.allclose(xhat_seq, xhat_ref_seq, rtol=1e-4, atol=1e-4)
    assert jnp.allclose(hn_new, hn_ref, rtol=1e-4, atol=1e-4)

    # single-step variant (== module.forward(y))
    xhat_1, hn_1 = rnn_fw_step(xhat0, y_seq[0], hn0, params,
                               n_layers=n_layers, hidden_dim=hidden_dim, m=m, n=n)
    jax.block_until_ready((xhat_1, hn_1))
    xhat_ref_1, hn_ref_1 = rnn_fw_reference_sequence(
        xhat0, y_seq[:1], hn0, params, n_layers=n_layers, hidden_dim=hidden_dim)
    assert jnp.allclose(xhat_1, xhat_ref_1[0], rtol=1e-4, atol=1e-4)
    assert jnp.allclose(hn_1, hn_ref_1, rtol=1e-4, atol=1e-4)

    print("KERNEL_OK")
</pallas_src>

<mosaic_0001>
module attributes {stable_mosaic.version = 11 : i64} {
  func.func @rnn_fw_seq_kernel(%arg0: i32, %arg1: memref<1x1x4xf32, #tpu.memory_space<vmem>>, %arg2: memref<1x4xf32, #tpu.memory_space<vmem>>, %arg3: memref<2x1x32xf32, #tpu.memory_space<vmem>>, %arg4: memref<4x4xf32, #tpu.memory_space<vmem>>, %arg5: memref<4x32xf32, #tpu.memory_space<vmem>>, %arg6: memref<4x32xf32, #tpu.memory_space<vmem>>, %arg7: memref<1x32xf32, #tpu.memory_space<vmem>>, %arg8: memref<2x3x32x32xf32, #tpu.memory_space<vmem>>, %arg9: memref<2x3x32x32xf32, #tpu.memory_space<vmem>>, %arg10: memref<2x3x1x32xf32, #tpu.memory_space<vmem>>, %arg11: memref<2x3x1x32xf32, #tpu.memory_space<vmem>>, %arg12: memref<32x4xf32, #tpu.memory_space<vmem>>, %arg13: memref<1x4xf32, #tpu.memory_space<vmem>>, %arg14: memref<8x1x4xf32, #tpu.memory_space<vmem>>, %arg15: memref<2x1x32xf32, #tpu.memory_space<vmem>>, %arg16: memref<1x4xf32, #tpu.memory_space<vmem>>, %arg17: memref<2x1x32xf32, #tpu.memory_space<vmem>>) attributes {dimension_semantics = [#tpu.dimension_semantics<arbitrary>], iteration_bounds = array<i64: 8>, scalar_prefetch = 0 : i64, scratch_operands = 2 : i64, tpu.core_type = #tpu.core_type<tc>, window_params = [{transform_indices = @transform_0, window_bounds = array<i64: 1, 1, 4>}, {pipeline_mode = #tpu.pipeline_mode<synchronous>, transform_indices = @transform_1, window_bounds = array<i64: 1, 4>}, {pipeline_mode = #tpu.pipeline_mode<synchronous>, transform_indices = @transform_2, window_bounds = array<i64: 2, 1, 32>}, {pipeline_mode = #tpu.pipeline_mode<synchronous>, transform_indices = @transform_3, window_bounds = array<i64: 4, 4>}, {pipeline_mode = #tpu.pipeline_mode<synchronous>, transform_indices = @transform_4, window_bounds = array<i64: 4, 32>}, {pipeline_mode = #tpu.pipeline_mode<synchronous>, transform_indices = @transform_5, window_bounds = array<i64: 4, 32>}, {pipeline_mode = #tpu.pipeline_mode<synchronous>, transform_indices = @transform_6, window_bounds = array<i64: 1, 32>}, {pipeline_mode = #tpu.pipeline_mode<synchronous>, transform_indices = @transform_7, window_bounds = array<i64: 2, 3, 32, 32>}, {pipeline_mode = #tpu.pipeline_mode<synchronous>, transform_indices = @transform_8, window_bounds = array<i64: 2, 3, 32, 32>}, {pipeline_mode = #tpu.pipeline_mode<synchronous>, transform_indices = @transform_9, window_bounds = array<i64: 2, 3, 1, 32>}, {pipeline_mode = #tpu.pipeline_mode<synchronous>, transform_indices = @transform_10, window_bounds = array<i64: 2, 3, 1, 32>}, {pipeline_mode = #tpu.pipeline_mode<synchronous>, transform_indices = @transform_11, window_bounds = array<i64: 32, 4>}, {pipeline_mode = #tpu.pipeline_mode<synchronous>, transform_indices = @transform_12, window_bounds = array<i64: 1, 4>}, {pipeline_mode = #tpu.pipeline_mode<synchronous>, transform_indices = @transform_13, window_bounds = array<i64: 8, 1, 4>}, {pipeline_mode = #tpu.pipeline_mode<synchronous>, transform_indices = @transform_14, window_bounds = array<i64: 2, 1, 32>}]} {
    %c0_i32 = arith.constant 0 : i32
    %0 = arith.cmpi eq, %arg0, %c0_i32 : i32
    %1 = arith.extui %0 : i1 to i32
    %c0_i32_0 = arith.constant 0 : i32
    %2 = arith.cmpi ne, %1, %c0_i32_0 : i32
    scf.if %2 {
      %c0_151 = arith.constant 0 : index
      %c0_152 = arith.constant 0 : index
      %154 = vector.load %arg2[%c0_151, %c0_152] : memref<1x4xf32, #tpu.memory_space<vmem>>, vector<1x4xf32>
      %c0_153 = arith.constant 0 : index
      %c0_154 = arith.constant 0 : index
      %155 = vector.load %arg16[%c0_153, %c0_154] : memref<1x4xf32, #tpu.memory_space<vmem>>, vector<1x4xf32>
      tpu.vector_store %arg16[%c0_153, %c0_154], %154 {strides = array<i32>} : memref<1x4xf32, #tpu.memory_space<vmem>>, vector<1x4xf32>,
      %c0_155 = arith.constant 0 : index
      %c0_156 = arith.constant 0 : index
      %c0_157 = arith.constant 0 : index
      %156 = vector.load %arg3[%c0_155, %c0_156, %c0_157] : memref<2x1x32xf32, #tpu.memory_space<vmem>>, vector<2x1x32xf32>
      %c0_158 = arith.constant 0 : index
      %c0_159 = arith.constant 0 : index
      %c0_160 = arith.constant 0 : index
      %157 = vector.load %arg17[%c0_158, %c0_159, %c0_160] : memref<2x1x32xf32, #tpu.memory_space<vmem>>, vector<2x1x32xf32>
      tpu.vector_store %arg17[%c0_158, %c0_159, %c0_160], %156 {strides = array<i32>} : memref<2x1x32xf32, #tpu.memory_space<vmem>>, vector<2x1x32xf32>,
    } else {
    }
    %c0 = arith.constant 0 : index
    %c0_1 = arith.constant 0 : index
    %3 = vector.load %arg16[%c0, %c0_1] : memref<1x4xf32, #tpu.memory_space<vmem>>, vector<1x4xf32>
    %c0_2 = arith.constant 0 : index
    %c0_3 = arith.constant 0 : index
    %c0_4 = arith.constant 0 : index
    %4 = vector.load %arg1[%c0_2, %c0_3, %c0_4] : memref<1x1x4xf32, #tpu.memory_space<vmem>>, vector<1x1x4xf32>
    %5 = vector.shape_cast %4 : vector<1x1x4xf32> to vector<1x4xf32>
    %c0_5 = arith.constant 0 : index
    %c0_6 = arith.constant 0 : index
    %6 = vector.load %arg5[%c0_5, %c0_6] : memref<4x32xf32, #tpu.memory_space<vmem>>, vector<4x32xf32>
    %cst = arith.constant dense<0.000000e+00> : vector<1x32xf32>
    %7 = tpu.matmul %3, %6, %cst {dimension_numbers = #tpu.dot_dimension_numbers<[1], [0], [0], [1], [0, 0, 1, 1], [], []>} : vector<1x4xf32>, vector<4x32xf32>, vector<1x32xf32> -> vector<1x32xf32>
    %c0_7 = arith.constant 0 : index
    %c0_8 = arith.constant 0 : index
    %8 = vector.load %arg6[%c0_7, %c0_8] : memref<4x32xf32, #tpu.memory_space<vmem>>, vector<4x32xf32>
    %cst_9 = arith.constant dense<0.000000e+00> : vector<1x32xf32>
    %9 = tpu.matmul %5, %8, %cst_9 {dimension_numbers = #tpu.dot_dimension_numbers<[1], [0], [0], [1], [0, 0, 1, 1], [], []>} : vector<1x4xf32>, vector<4x32xf32>, vector<1x32xf32> -> vector<1x32xf32>
    %10 = arith.addf %7, %9 : vector<1x32xf32>
    %c0_10 = arith.constant 0 : index
    %c0_11 = arith.constant 0 : index
    %11 = vector.load %arg7[%c0_10, %c0_11] : memref<1x32xf32, #tpu.memory_space<vmem>>, vector<1x32xf32>
    %12 = arith.addf %10, %11 : vector<1x32xf32>
    %cst_12 = arith.constant 0.000000e+00 : f32
    %13 = vector.broadcast %cst_12 : f32 to vector<1x32xf32>
    %14 = arith.maximumf %12, %13 : vector<1x32xf32>
    %c0_13 = arith.constant 0 : index
    %c0_14 = arith.constant 0 : index
    %c0_15 = arith.constant 0 : index
    %15 = vector.load %arg17[%c0_13, %c0_14, %c0_15] : memref<2x1x32xf32, #tpu.memory_space<vmem>>, vector<1x1x32xf32>
    %16 = vector.shape_cast %15 : vector<1x1x32xf32> to vector<1x32xf32>
    %c0_16 = arith.constant 0 : index
    %c0_17 = arith.constant 0 : index
    %c0_18 = arith.constant 0 : index
    %c0_19 = arith.constant 0 : index
    %17 = vector.load %arg8[%c0_16, %c0_17, %c0_18, %c0_19] : memref<2x3x32x32xf32, #tpu.memory_space<vmem>>, vector<1x1x32x32xf32>
    %18 = vector.shape_cast %17 : vector<1x1x32x32xf32> to vector<32x32xf32>
    %cst_20 = arith.constant dense<0.000000e+00> : vector<1x32xf32>
    %19 = tpu.matmul %14, %18, %cst_20 {dimension_numbers = #tpu.dot_dimension_numbers<[1], [0], [0], [1], [0, 0, 1, 1], [], []>} : vector<1x32xf32>, vector<32x32xf32>, vector<1x32xf32> -> vector<1x32xf32>
    %c0_21 = arith.constant 0 : index
    %c0_22 = arith.constant 0 : index
    %c0_23 = arith.constant 0 : index
    %c0_24 = arith.constant 0 : index
    %20 = vector.load %arg10[%c0_21, %c0_22, %c0_23, %c0_24] : memref<2x3x1x32xf32, #tpu.memory_space<vmem>>, vector<1x1x1x32xf32>
    %21 = vector.shape_cast %20 : vector<1x1x1x32xf32> to vector<1x32xf32>
    %22 = arith.addf %19, %21 : vector<1x32xf32>
    %c0_25 = arith.constant 0 : index
    %c1 = arith.constant 1 : index
    %c0_26 = arith.constant 0 : index
    %c0_27 = arith.constant 0 : index
    %23 = vector.load %arg8[%c0_25, %c1, %c0_26, %c0_27] : memref<2x3x32x32xf32, #tpu.memory_space<vmem>>, vector<1x1x32x32xf32>
    %24 = vector.shape_cast %23 : vector<1x1x32x32xf32> to vector<32x32xf32>
    %cst_28 = arith.constant dense<0.000000e+00> : vector<1x32xf32>
    %25 = tpu.matmul %14, %24, %cst_28 {dimension_numbers = #tpu.dot_dimension_numbers<[1], [0], [0], [1], [0, 0, 1, 1], [], []>} : vector<1x32xf32>, vector<32x32xf32>, vector<1x32xf32> -> vector<1x32xf32>
    %c0_29 = arith.constant 0 : index
    %c1_30 = arith.constant 1 : index
    %c0_31 = arith.constant 0 : index
    %c0_32 = arith.constant 0 : index
    %26 = vector.load %arg10[%c0_29, %c1_30, %c0_31, %c0_32] : memref<2x3x1x32xf32, #tpu.memory_space<vmem>>, vector<1x1x1x32xf32>
    %27 = vector.shape_cast %26 : vector<1x1x1x32xf32> to vector<1x32xf32>
    %28 = arith.addf %25, %27 : vector<1x32xf32>
    %c0_33 = arith.constant 0 : index
    %c2 = arith.constant 2 : index
    %c0_34 = arith.constant 0 : index
    %c0_35 = arith.constant 0 : index
    %29 = vector.load %arg8[%c0_33, %c2, %c0_34, %c0_35] : memref<2x3x32x32xf32, #tpu.memory_space<vmem>>, vector<1x1x32x32xf32>
    %30 = vector.shape_cast %29 : vector<1x1x32x32xf32> to vector<32x32xf32>
    %cst_36 = arith.constant dense<0.000000e+00> : vector<1x32xf32>
    %31 = tpu.matmul %14, %30, %cst_36 {dimension_numbers = #tpu.dot_dimension_numbers<[1], [0], [0], [1], [0, 0, 1, 1], [], []>} : vector<1x32xf32>, vector<32x32xf32>, vector<1x32xf32> -> vector<1x32xf32>
    %c0_37 = arith.constant 0 : index
    %c2_38 = arith.constant 2 : index
    %c0_39 = arith.constant 0 : index
    %c0_40 = arith.constant 0 : index
    %32 = vector.load %arg10[%c0_37, %c2_38, %c0_39, %c0_40] : memref<2x3x1x32xf32, #tpu.memory_space<vmem>>, vector<1x1x1x32xf32>
    %33 = vector.shape_cast %32 : vector<1x1x1x32xf32> to vector<1x32xf32>
    %34 = arith.addf %31, %33 : vector<1x32xf32>
    %c0_41 = arith.constant 0 : index
    %c0_42 = arith.constant 0 : index
    %c0_43 = arith.constant 0 : index
    %c0_44 = arith.constant 0 : index
    %35 = vector.load %arg9[%c0_41, %c0_42, %c0_43, %c0_44] : memref<2x3x32x32xf32, #tpu.memory_space<vmem>>, vector<1x1x32x32xf32>
    %36 = vector.shape_cast %35 : vector<1x1x32x32xf32> to vector<32x32xf32>
    %cst_45 = arith.constant dense<0.000000e+00> : vector<1x32xf32>
    %37 = tpu.matmul %16, %36, %cst_45 {dimension_numbers = #tpu.dot_dimension_numbers<[1], [0], [0], [1], [0, 0, 1, 1], [], []>} : vector<1x32xf32>, vector<32x32xf32>, vector<1x32xf32> -> vector<1x32xf32>
    %c0_46 = arith.constant 0 : index
    %c0_47 = arith.constant 0 : index
    %c0_48 = arith.constant 0 : index
    %c0_49 = arith.constant 0 : index
    %38 = vector.load %arg11[%c0_46, %c0_47, %c0_48, %c0_49] : memref<2x3x1x32xf32, #tpu.memory_space<vmem>>, vector<1x1x1x32xf32>
    %39 = vector.shape_cast %38 : vector<1x1x1x32xf32> to vector<1x32xf32>
    %40 = arith.addf %37, %39 : vector<1x32xf32>
    %c0_50 = arith.constant 0 : index
    %c1_51 = arith.constant 1 : index
    %c0_52 = arith.constant 0 : index
    %c0_53 = arith.constant 0 : index
    %41 = vector.load %arg9[%c0_50, %c1_51, %c0_52, %c0_53] : memref<2x3x32x32xf32, #tpu.memory_space<vmem>>, vector<1x1x32x32xf32>
    %42 = vector.shape_cast %41 : vector<1x1x32x32xf32> to vector<32x32xf32>
    %cst_54 = arith.constant dense<0.000000e+00> : vector<1x32xf32>
    %43 = tpu.matmul %16, %42, %cst_54 {dimension_numbers = #tpu.dot_dimension_numbers<[1], [0], [0], [1], [0, 0, 1, 1], [], []>} : vector<1x32xf32>, vector<32x32xf32>, vector<1x32xf32> -> vector<1x32xf32>
    %c0_55 = arith.constant 0 : index
    %c1_56 = arith.constant 1 : index
    %c0_57 = arith.constant 0 : index
    %c0_58 = arith.constant 0 : index
    %44 = vector.load %arg11[%c0_55, %c1_56, %c0_57, %c0_58] : memref<2x3x1x32xf32, #tpu.memory_space<vmem>>, vector<1x1x1x32xf32>
    %45 = vector.shape_cast %44 : vector<1x1x1x32xf32> to vector<1x32xf32>
    %46 = arith.addf %43, %45 : vector<1x32xf32>
    %c0_59 = arith.constant 0 : index
    %c2_60 = arith.constant 2 : index
    %c0_61 = arith.constant 0 : index
    %c0_62 = arith.constant 0 : index
    %47 = vector.load %arg9[%c0_59, %c2_60, %c0_61, %c0_62] : memref<2x3x32x32xf32, #tpu.memory_space<vmem>>, vector<1x1x32x32xf32>
    %48 = vector.shape_cast %47 : vector<1x1x32x32xf32> to vector<32x32xf32>
    %cst_63 = arith.constant dense<0.000000e+00> : vector<1x32xf32>
    %49 = tpu.matmul %16, %48, %cst_63 {dimension_numbers = #tpu.dot_dimension_numbers<[1], [0], [0], [1], [0, 0, 1, 1], [], []>} : vector<1x32xf32>, vector<32x32xf32>, vector<1x32xf32> -> vector<1x32xf32>
    %c0_64 = arith.constant 0 : index
    %c2_65 = arith.constant 2 : index
    %c0_66 = arith.constant 0 : index
    %c0_67 = arith.constant 0 : index
    %50 = vector.load %arg11[%c0_64, %c2_65, %c0_66, %c0_67] : memref<2x3x1x32xf32, #tpu.memory_space<vmem>>, vector<1x1x1x32xf32>
    %51 = vector.shape_cast %50 : vector<1x1x1x32xf32> to vector<1x32xf32>
    %52 = arith.addf %49, %51 : vector<1x32xf32>
    %53 = arith.addf %22, %40 : vector<1x32xf32>
    %54 = arith.negf %53 : vector<1x32xf32>
    %55 = math.exp %54 : vector<1x32xf32>
    %cst_68 = arith.constant 1.000000e+00 : f32
    %56 = vector.broadcast %cst_68 : f32 to vector<1x32xf32>
    %57 = arith.addf %56, %55 : vector<1x32xf32>
    %58 = arith.divf %56, %57 : vector<1x32xf32>
    %59 = arith.addf %28, %46 : vector<1x32xf32>
    %60 = arith.negf %59 : vector<1x32xf32>
    %61 = math.exp %60 : vector<1x32xf32>
    %cst_69 = arith.constant 1.000000e+00 : f32
    %62 = vector.broadcast %cst_69 : f32 to vector<1x32xf32>
    %63 = arith.addf %62, %61 : vector<1x32xf32>
    %64 = arith.divf %62, %63 : vector<1x32xf32>
    %65 = arith.mulf %58, %52 : vector<1x32xf32>
    %66 = arith.addf %34, %65 : vector<1x32xf32>
    %67 = math.tanh %66 : vector<1x32xf32>
    %cst_70 = arith.constant 1.000000e+00 : f32
    %68 = vector.broadcast %cst_70 : f32 to vector<1x32xf32>
    %69 = arith.subf %68, %64 : vector<1x32xf32>
    %70 = arith.mulf %69, %67 : vector<1x32xf32>
    %71 = arith.mulf %64, %16 : vector<1x32xf32>
    %72 = arith.addf %70, %71 : vector<1x32xf32>
    %c0_71 = arith.constant 0 : index
    %c0_72 = arith.constant 0 : index
    %c0_73 = arith.constant 0 : index
    %73 = vector.load %arg17[%c0_71, %c0_72, %c0_73] : memref<2x1x32xf32, #tpu.memory_space<vmem>>, vector<1x1x32xf32>
    %74 = vector.shape_cast %73 : vector<1x1x32xf32> to vector<1x32xf32>
    %75 = vector.shape_cast %72 : vector<1x32xf32> to vector<1x1x32xf32>
    tpu.vector_store %arg17[%c0_71, %c0_72, %c0_73], %75 {strides = array<i32>} : memref<2x1x32xf32, #tpu.memory_space<vmem>>, vector<1x1x32xf32>,
    %c1_74 = arith.constant 1 : index
    %c0_75 = arith.constant 0 : index
    %c0_76 = arith.constant 0 : index
    %76 = vector.load %arg17[%c1_74, %c0_75, %c0_76] : memref<2x1x32xf32, #tpu.memory_space<vmem>>, vector<1x1x32xf32>
    %77 = vector.shape_cast %76 : vector<1x1x32xf32> to vector<1x32xf32>
    %c1_77 = arith.constant 1 : index
    %c0_78 = arith.constant 0 : index
    %c0_79 = arith.constant 0 : index
    %c0_80 = arith.constant 0 : index
    %78 = vector.load %arg8[%c1_77, %c0_78, %c0_79, %c0_80] : memref<2x3x32x32xf32, #tpu.memory_space<vmem>>, vector<1x1x32x32xf32>
    %79 = vector.shape_cast %78 : vector<1x1x32x32xf32> to vector<32x32xf32>
    %cst_81 = arith.constant dense<0.000000e+00> : vector<1x32xf32>
    %80 = tpu.matmul %72, %79, %cst_81 {dimension_numbers = #tpu.dot_dimension_numbers<[1], [0], [0], [1], [0, 0, 1, 1], [], []>} : vector<1x32xf32>, vector<32x32xf32>, vector<1x32xf32> -> vector<1x32xf32>
    %c1_82 = arith.constant 1 : index
    %c0_83 = arith.constant 0 : index
    %c0_84 = arith.constant 0 : index
    %c0_85 = arith.constant 0 : index
    %81 = vector.load %arg10[%c1_82, %c0_83, %c0_84, %c0_85] : memref<2x3x1x32xf32, #tpu.memory_space<vmem>>, vector<1x1x1x32xf32>
    %82 = vector.shape_cast %81 : vector<1x1x1x32xf32> to vector<1x32xf32>
    %83 = arith.addf %80, %82 : vector<1x32xf32>
    %c1_86 = arith.constant 1 : index
    %c1_87 = arith.constant 1 : index
    %c0_88 = arith.constant 0 : index
    %c0_89 = arith.constant 0 : index
    %84 = vector.load %arg8[%c1_86, %c1_87, %c0_88, %c0_89] : memref<2x3x32x32xf32, #tpu.memory_space<vmem>>, vector<1x1x32x32xf32>
    %85 = vector.shape_cast %84 : vector<1x1x32x32xf32> to vector<32x32xf32>
    %cst_90 = arith.constant dense<0.000000e+00> : vector<1x32xf32>
    %86 = tpu.matmul %72, %85, %cst_90 {dimension_numbers = #tpu.dot_dimension_numbers<[1], [0], [0], [1], [0, 0, 1, 1], [], []>} : vector<1x32xf32>, vector<32x32xf32>, vector<1x32xf32> -> vector<1x32xf32>
    %c1_91 = arith.constant 1 : index
    %c1_92 = arith.constant 1 : index
    %c0_93 = arith.constant 0 : index
    %c0_94 = arith.constant 0 : index
    %87 = vector.load %arg10[%c1_91, %c1_92, %c0_93, %c0_94] : memref<2x3x1x32xf32, #tpu.memory_space<vmem>>, vector<1x1x1x32xf32>
    %88 = vector.shape_cast %87 : vector<1x1x1x32xf32> to vector<1x32xf32>
    %89 = arith.addf %86, %88 : vector<1x32xf32>
    %c1_95 = arith.constant 1 : index
    %c2_96 = arith.constant 2 : index
    %c0_97 = arith.constant 0 : index
    %c0_98 = arith.constant 0 : index
    %90 = vector.load %arg8[%c1_95, %c2_96, %c0_97, %c0_98] : memref<2x3x32x32xf32, #tpu.memory_space<vmem>>, vector<1x1x32x32xf32>
    %91 = vector.shape_cast %90 : vector<1x1x32x32xf32> to vector<32x32xf32>
    %cst_99 = arith.constant dense<0.000000e+00> : vector<1x32xf32>
    %92 = tpu.matmul %72, %91, %cst_99 {dimension_numbers = #tpu.dot_dimension_numbers<[1], [0], [0], [1], [0, 0, 1, 1], [], []>} : vector<1x32xf32>, vector<32x32xf32>, vector<1x32xf32> -> vector<1x32xf32>
    %c1_100 = arith.constant 1 : index
    %c2_101 = arith.constant 2 : index
    %c0_102 = arith.constant 0 : index
    %c0_103 = arith.constant 0 : index
    %93 = vector.load %arg10[%c1_100, %c2_101, %c0_102, %c0_103] : memref<2x3x1x32xf32, #tpu.memory_space<vmem>>, vector<1x1x1x32xf32>
    %94 = vector.shape_cast %93 : vector<1x1x1x32xf32> to vector<1x32xf32>
    %95 = arith.addf %92, %94 : vector<1x32xf32>
    %c1_104 = arith.constant 1 : index
    %c0_105 = arith.constant 0 : index
    %c0_106 = arith.constant 0 : index
    %c0_107 = arith.constant 0 : index
    %96 = vector.load %arg9[%c1_104, %c0_105, %c0_106, %c0_107] : memref<2x3x32x32xf32, #tpu.memory_space<vmem>>, vector<1x1x32x32xf32>
    %97 = vector.shape_cast %96 : vector<1x1x32x32xf32> to vector<32x32xf32>
    %cst_108 = arith.constant dense<0.000000e+00> : vector<1x32xf32>
    %98 = tpu.matmul %77, %97, %cst_108 {dimension_numbers = #tpu.dot_dimension_numbers<[1], [0], [0], [1], [0, 0, 1, 1], [], []>} : vector<1x32xf32>, vector<32x32xf32>, vector<1x32xf32> -> vector<1x32xf32>
    %c1_109 = arith.constant 1 : index
    %c0_110 = arith.constant 0 : index
    %c0_111 = arith.constant 0 : index
    %c0_112 = arith.constant 0 : index
    %99 = vector.load %arg11[%c1_109, %c0_110, %c0_111, %c0_112] : memref<2x3x1x32xf32, #tpu.memory_space<vmem>>, vector<1x1x1x32xf32>
    %100 = vector.shape_cast %99 : vector<1x1x1x32xf32> to vector<1x32xf32>
    %101 = arith.addf %98, %100 : vector<1x32xf32>
    %c1_113 = arith.constant 1 : index
    %c1_114 = arith.constant 1 : index
    %c0_115 = arith.constant 0 : index
    %c0_116 = arith.constant 0 : index
    %102 = vector.load %arg9[%c1_113, %c1_114, %c0_115, %c0_116] : memref<2x3x32x32xf32, #tpu.memory_space<vmem>>, vector<1x1x32x32xf32>
    %103 = vector.shape_cast %102 : vector<1x1x32x32xf32> to vector<32x32xf32>
    %cst_117 = arith.constant dense<0.000000e+00> : vector<1x32xf32>
    %104 = tpu.matmul %77, %103, %cst_117 {dimension_numbers = #tpu.dot_dimension_numbers<[1], [0], [0], [1], [0, 0, 1, 1], [], []>} : vector<1x32xf32>, vector<32x32xf32>, vector<1x32xf32> -> vector<1x32xf32>
    %c1_118 = arith.constant 1 : index
    %c1_119 = arith.constant 1 : index
    %c0_120 = arith.constant 0 : index
    %c0_121 = arith.constant 0 : index
    %105 = vector.load %arg11[%c1_118, %c1_119, %c0_120, %c0_121] : memref<2x3x1x32xf32, #tpu.memory_space<vmem>>, vector<1x1x1x32xf32>
    %106 = vector.shape_cast %105 : vector<1x1x1x32xf32> to vector<1x32xf32>
    %107 = arith.addf %104, %106 : vector<1x32xf32>
    %c1_122 = arith.constant 1 : index
    %c2_123 = arith.constant 2 : index
    %c0_124 = arith.constant 0 : index
    %c0_125 = arith.constant 0 : index
    %108 = vector.load %arg9[%c1_122, %c2_123, %c0_124, %c0_125] : memref<2x3x32x32xf32, #tpu.memory_space<vmem>>, vector<1x1x32x32xf32>
    %109 = vector.shape_cast %108 : vector<1x1x32x32xf32> to vector<32x32xf32>
    %cst_126 = arith.constant dense<0.000000e+00> : vector<1x32xf32>
    %110 = tpu.matmul %77, %109, %cst_126 {dimension_numbers = #tpu.dot_dimension_numbers<[1], [0], [0], [1], [0, 0, 1, 1], [], []>} : vector<1x32xf32>, vector<32x32xf32>, vector<1x32xf32> -> vector<1x32xf32>
    %c1_127 = arith.constant 1 : index
    %c2_128 = arith.constant 2 : index
    %c0_129 = arith.constant 0 : index
    %c0_130 = arith.constant 0 : index
    %111 = vector.load %arg11[%c1_127, %c2_128, %c0_129, %c0_130] : memref<2x3x1x32xf32, #tpu.memory_space<vmem>>, vector<1x1x1x32xf32>
    %112 = vector.shape_cast %111 : vector<1x1x1x32xf32> to vector<1x32xf32>
    %113 = arith.addf %110, %112 : vector<1x32xf32>
    %114 = arith.addf %83, %101 : vector<1x32xf32>
    %115 = arith.negf %114 : vector<1x32xf32>
    %116 = math.exp %115 : vector<1x32xf32>
    %cst_131 = arith.constant 1.000000e+00 : f32
    %117 = vector.broadcast %cst_131 : f32 to vector<1x32xf32>
    %118 = arith.addf %117, %116 : vector<1x32xf32>
    %119 = arith.divf %117, %118 : vector<1x32xf32>
    %120 = arith.addf %89, %107 : vector<1x32xf32>
    %121 = arith.negf %120 : vector<1x32xf32>
    %122 = math.exp %121 : vector<1x32xf32>
    %cst_132 = arith.constant 1.000000e+00 : f32
    %123 = vector.broadcast %cst_132 : f32 to vector<1x32xf32>
    %124 = arith.addf %123, %122 : vector<1x32xf32>
    %125 = arith.divf %123, %124 : vector<1x32xf32>
    %126 = arith.mulf %119, %113 : vector<1x32xf32>
    %127 = arith.addf %95, %126 : vector<1x32xf32>
    %128 = math.tanh %127 : vector<1x32xf32>
    %cst_133 = arith.constant 1.000000e+00 : f32
    %129 = vector.broadcast %cst_133 : f32 to vector<1x32xf32>
    %130 = arith.subf %129, %125 : vector<1x32xf32>
    %131 = arith.mulf %130, %128 : vector<1x32xf32>
    %132 = arith.mulf %125, %77 : vector<1x32xf32>
    %133 = arith.addf %131, %132 : vector<1x32xf32>
    %c1_134 = arith.constant 1 : index
    %c0_135 = arith.constant 0 : index
    %c0_136 = arith.constant 0 : index
    %134 = vector.load %arg17[%c1_134, %c0_135, %c0_136] : memref<2x1x32xf32, #tpu.memory_space<vmem>>, vector<1x1x32xf32>
    %135 = vector.shape_cast %134 : vector<1x1x32xf32> to vector<1x32xf32>
    %136 = vector.shape_cast %133 : vector<1x32xf32> to vector<1x1x32xf32>
    tpu.vector_store %arg17[%c1_134, %c0_135, %c0_136], %136 {strides = array<i32>} : memref<2x1x32xf32, #tpu.memory_space<vmem>>, vector<1x1x32xf32>,
    %c0_137 = arith.constant 0 : index
    %c0_138 = arith.constant 0 : index
    %137 = vector.load %arg12[%c0_137, %c0_138] : memref<32x4xf32, #tpu.memory_space<vmem>>, vector<32x4xf32>
    %cst_139 = arith.constant dense<0.000000e+00> : vector<1x4xf32>
    %138 = tpu.matmul %133, %137, %cst_139 {dimension_numbers = #tpu.dot_dimension_numbers<[1], [0], [0], [1], [0, 0, 1, 1], [], []>} : vector<1x32xf32>, vector<32x4xf32>, vector<1x4xf32> -> vector<1x4xf32>
    %c0_140 = arith.constant 0 : index
    %c0_141 = arith.constant 0 : index
    %139 = vector.load %arg13[%c0_140, %c0_141] : memref<1x4xf32, #tpu.memory_space<vmem>>, vector<1x4xf32>
    %140 = arith.addf %138, %139 : vector<1x4xf32>
    %cst_142 = arith.constant 0.000000e+00 : f32
    %141 = vector.broadcast %cst_142 : f32 to vector<1x4xf32>
    %142 = arith.maximumf %140, %141 : vector<1x4xf32>
    %c0_143 = arith.constant 0 : index
    %c0_144 = arith.constant 0 : index
    %143 = vector.load %arg4[%c0_143, %c0_144] : memref<4x4xf32, #tpu.memory_space<vmem>>, vector<4x4xf32>
    %cst_145 = arith.constant dense<0.000000e+00> : vector<1x4xf32>
    %144 = tpu.matmul %3, %143, %cst_145 {dimension_numbers = #tpu.dot_dimension_numbers<[1], [0], [0], [1], [0, 0, 1, 1], [], []>} : vector<1x4xf32>, vector<4x4xf32>, vector<1x4xf32> -> vector<1x4xf32>
    %145 = arith.addf %144, %142 : vector<1x4xf32>
    %146 = arith.index_cast %arg0 : i32 to index
    %c0_146 = arith.constant 0 : index
    %c0_147 = arith.constant 0 : index
    %147 = vector.load %arg14[%146, %c0_146, %c0_147] : memref<8x1x4xf32, #tpu.memory_space<vmem>>, vector<1x1x4xf32>
    %148 = vector.shape_cast %147 : vector<1x1x4xf32> to vector<1x4xf32>
    %149 = vector.shape_cast %145 : vector<1x4xf32> to vector<1x1x4xf32>
    tpu.vector_store %arg14[%146, %c0_146, %c0_147], %149 {strides = array<i32>} : memref<8x1x4xf32, #tpu.memory_space<vmem>>, vector<1x1x4xf32>,
    %c0_148 = arith.constant 0 : index
    %c0_149 = arith.constant 0 : index
    %150 = vector.load %arg16[%c0_148, %c0_149] : memref<1x4xf32, #tpu.memory_space<vmem>>, vector<1x4xf32>
    tpu.vector_store %arg16[%c0_148, %c0_149], %145 {strides = array<i32>} : memref<1x4xf32, #tpu.memory_space<vmem>>, vector<1x4xf32>,
    %c7_i32 = arith.constant 7 : i32
    %151 = arith.cmpi eq, %arg0, %c7_i32 : i32
    %152 = arith.extui %151 : i1 to i32
    %c0_i32_150 = arith.constant 0 : i32
    %153 = arith.cmpi ne, %152, %c0_i32_150 : i32
    scf.if %153 {
      %c0_151 = arith.constant 0 : index
      %c0_152 = arith.constant 0 : index
      %c0_153 = arith.constant 0 : index
      %154 = vector.load %arg17[%c0_151, %c0_152, %c0_153] : memref<2x1x32xf32, #tpu.memory_space<vmem>>, vector<2x1x32xf32>
      %c0_154 = arith.constant 0 : index
      %c0_155 = arith.constant 0 : index
      %c0_156 = arith.constant 0 : index
      %155 = vector.load %arg15[%c0_154, %c0_155, %c0_156] : memref<2x1x32xf32, #tpu.memory_space<vmem>>, vector<2x1x32xf32>
      tpu.vector_store %arg15[%c0_154, %c0_155, %c0_156], %154 {strides = array<i32>} : memref<2x1x32xf32, #tpu.memory_space<vmem>>, vector<2x1x32xf32>,
    } else {
    }
    return
  }
  func.func @transform_0(%arg0: i32) -> (i32, i32, i32) {
    %c0_i32 = arith.constant 0 : i32
    %c0_i32_0 = arith.constant 0 : i32
    %c0_i32_1 = arith.constant 0 : i32
    return %arg0, %c0_i32, %c0_i32_0 : i32, i32, i32
  }
  func.func @transform_1(%arg0: i32) -> (i32, i32) {
    %c0_i32 = arith.constant 0 : i32
    %c0_i32_0 = arith.constant 0 : i32
    %c0_i32_1 = arith.constant 0 : i32
    return %c0_i32, %c0_i32_0 : i32, i32
  }
  func.func @transform_2(%arg0: i32) -> (i32, i32, i32) {
    %c0_i32 = arith.constant 0 : i32
    %c0_i32_0 = arith.constant 0 : i32
    %c0_i32_1 = arith.constant 0 : i32
    %c0_i32_2 = arith.constant 0 : i32
    return %c0_i32, %c0_i32_0, %c0_i32_1 : i32, i32, i32
  }
  func.func @transform_3(%arg0: i32) -> (i32, i32) {
    %c0_i32 = arith.constant 0 : i32
    %c0_i32_0 = arith.constant 0 : i32
    %c0_i32_1 = arith.constant 0 : i32
    return %c0_i32, %c0_i32_0 : i32, i32
  }
  func.func @transform_4(%arg0: i32) -> (i32, i32) {
    %c0_i32 = arith.constant 0 : i32
    %c0_i32_0 = arith.constant 0 : i32
    %c0_i32_1 = arith.constant 0 : i32
    return %c0_i32, %c0_i32_0 : i32, i32
  }
  func.func @transform_5(%arg0: i32) -> (i32, i32) {
    %c0_i32 = arith.constant 0 : i32
    %c0_i32_0 = arith.constant 0 : i32
    %c0_i32_1 = arith.constant 0 : i32
    return %c0_i32, %c0_i32_0 : i32, i32
  }
  func.func @transform_6(%arg0: i32) -> (i32, i32) {
    %c0_i32 = arith.constant 0 : i32
    %c0_i32_0 = arith.constant 0 : i32
    %c0_i32_1 = arith.constant 0 : i32
    return %c0_i32, %c0_i32_0 : i32, i32
  }
  func.func @transform_7(%arg0: i32) -> (i32, i32, i32, i32) {
    %c0_i32 = arith.constant 0 : i32
    %c0_i32_0 = arith.constant 0 : i32
    %c0_i32_1 = arith.constant 0 : i32
    %c0_i32_2 = arith.constant 0 : i32
    %c0_i32_3 = arith.constant 0 : i32
    return %c0_i32, %c0_i32_0, %c0_i32_1, %c0_i32_2 : i32, i32, i32, i32
  }
  func.func @transform_8(%arg0: i32) -> (i32, i32, i32, i32) {
    %c0_i32 = arith.constant 0 : i32
    %c0_i32_0 = arith.constant 0 : i32
    %c0_i32_1 = arith.constant 0 : i32
    %c0_i32_2 = arith.constant 0 : i32
    %c0_i32_3 = arith.constant 0 : i32
    return %c0_i32, %c0_i32_0, %c0_i32_1, %c0_i32_2 : i32, i32, i32, i32
  }
  func.func @transform_9(%arg0: i32) -> (i32, i32, i32, i32) {
    %c0_i32 = arith.constant 0 : i32
    %c0_i32_0 = arith.constant 0 : i32
    %c0_i32_1 = arith.constant 0 : i32
    %c0_i32_2 = arith.constant 0 : i32
    %c0_i32_3 = arith.constant 0 : i32
    return %c0_i32, %c0_i32_0, %c0_i32_1, %c0_i32_2 : i32, i32, i32, i32
  }
  func.func @transform_10(%arg0: i32) -> (i32, i32, i32, i32) {
    %c0_i32 = arith.constant 0 : i32
    %c0_i32_0 = arith.constant 0 : i32
    %c0_i32_1 = arith.constant 0 : i32
    %c0_i32_2 = arith.constant 0 : i32
    %c0_i32_3 = arith.constant 0 : i32
    return %c0_i32, %c0_i32_0, %c0_i32_1, %c0_i32_2 : i32, i32, i32, i32
  }
  func.func @transform_11(%arg0: i32) -> (i32, i32) {
    %c0_i32 = arith.constant 0 : i32
    %c0_i32_0 = arith.constant 0 : i32
    %c0_i32_1 = arith.constant 0 : i32
    return %c0_i32, %c0_i32_0 : i32, i32
  }
  func.func @transform_12(%arg0: i32) -> (i32, i32) {
    %c0_i32 = arith.constant 0 : i32
    %c0_i32_0 = arith.constant 0 : i32
    %c0_i32_1 = arith.constant 0 : i32
    return %c0_i32, %c0_i32_0 : i32, i32
  }
  func.func @transform_13(%arg0: i32) -> (i32, i32, i32) {
    %c0_i32 = arith.constant 0 : i32
    %c0_i32_0 = arith.constant 0 : i32
    %c0_i32_1 = arith.constant 0 : i32
    %c0_i32_2 = arith.constant 0 : i32
    return %c0_i32, %c0_i32_0, %c0_i32_1 : i32, i32, i32
  }
  func.func @transform_14(%arg0: i32) -> (i32, i32, i32) {
    %c0_i32 = arith.constant 0 : i32
    %c0_i32_0 = arith.constant 0 : i32
    %c0_i32_1 = arith.constant 0 : i32
    %c0_i32_2 = arith.constant 0 : i32
    return %c0_i32, %c0_i32_0, %c0_i32_1 : i32, i32, i32
  }
}

</mosaic_0001>

<llo_original>
// kernel: tpu_custom_call.1
$region0: #{tpu_custom_call.1}
  #allocation0 [shape = 'u32[]', space=smem, size = 0x4, offset = 0x4, fixed_abs, tag = 'smem constant byte address 0x4 - core index']
  #allocation1 [shape = 'u32[144,128]{1,0:T(1,128)}', space=vmem, size = 0x12000, scoped, tag = 'internal scratch']
  #allocation2 [shape = 'f32[1,4]{1,0:T(1,128)}', space=vmem, size = 0x200, scoped, tag = 'scratch operand']
  #allocation3 [shape = 'f32[2,1,32]{2,1,0:T(1,128)}', space=vmem, size = 0x400, scoped, tag = 'scratch operand']
  %s0 = inlined_call_operand.vmem [shape: f32[8,1,4], index: 0, kind: input, shape index: {}]
  %s1 = inlined_call_operand.vmem [shape: f32[1,4], index: 1, kind: input, shape index: {}]
  %s2 = inlined_call_operand.vmem [shape: f32[2,1,32], index: 2, kind: input, shape index: {}]
  %s3 = inlined_call_operand.vmem [shape: f32[4,4], index: 3, kind: input, shape index: {}]
  %s4 = inlined_call_operand.vmem [shape: f32[4,32], index: 4, kind: input, shape index: {}]
  %s5 = inlined_call_operand.vmem [shape: f32[4,32], index: 5, kind: input, shape index: {}]
  %s6 = inlined_call_operand.vmem [shape: f32[1,32], index: 6, kind: input, shape index: {}]
  %s7 = inlined_call_operand.hbm [shape: f32[2,3,32,32], index: 7, kind: input, shape index: {}]
  %s8 = inlined_call_operand.hbm [shape: f32[2,3,32,32], index: 8, kind: input, shape index: {}]
  %s9 = inlined_call_operand.vmem [shape: f32[2,3,1,32], index: 9, kind: input, shape index: {}]
  %s10 = inlined_call_operand.vmem [shape: f32[2,3,1,32], index: 10, kind: input, shape index: {}]
  %s11 = inlined_call_operand.vmem [shape: f32[32,4], index: 11, kind: input, shape index: {}]
  %s12 = inlined_call_operand.vmem [shape: f32[1,4], index: 12, kind: input, shape index: {}]
  %s13 = inlined_call_operand.vmem [shape: f32[8,1,4], index: 13, kind: output, shape index: {0}]
  %s14 = inlined_call_operand.hbm [shape: f32[2,1,32], index: 14, kind: output, shape index: {1}]
  %15 = xla_tuple %s13, %s14
  %s16 = sld [smem:[#allocation0]]
  $region109: #{tpu_custom_call.1} parent=0
    _
  %s18 = ssub.s32 1, %s16
  %s19 = scalar_select 0, %s18, %s16
  $region1: #{tpu_custom_call.1} parent=0
    #allocation4 [shape = 'u8[98304]{0}', space=vmem, size = 0x18000, scoped, tag = 'input window, operand 7, single buffered']
    #allocation5 [shape = 's32[2]{0}', space=sflag, size = 0x8, scoped, tag = 'scoped memory for tpu_custom_call.1']
    #allocation6 [shape = 's32[2]{0}', space=sflag, size = 0x8, scoped, tag = 'scoped memory for tpu_custom_call.1']
    #allocation7 [shape = 'u8[98304]{0}', space=vmem, size = 0x18000, scoped, tag = 'input window, operand 8, single buffered']
    #allocation8 [shape = 's32[1]{0}', space=sflag, size = 0x4, scoped, tag = 'scoped memory for tpu_custom_call.1']
    #allocation9 [shape = 'u8[1024]{0}', space=vmem, size = 0x400, scoped, tag = 'output window, operand 1, single buffered']
    %20 = vsyncpa [#allocation5], 0
    %21 = vsyncpa [#allocation8], 0
    %22 = vsyncpa [#allocation6], 0
    loop: start=0, step=1, limit=10
    $region2: #{tpu_custom_call.1} parent=1 // loop_pre_header
      _
    $region3: #{tpu_custom_call.1} parent=1 // loop_header
      %s24 = sphi 0, %s28
      %p25 = scmp.ge.s32.totalorder %s24, 10
      %s34 = sphi 0, %s36
      %s37 = sphi 0, %s34
      %s38 = sphi 0, %s37
      %s54 = sphi 0, %s38
      %s58 = sphi 0, %s58
      %s60 = sphi 0, %s58
      %s61 = sphi 0, %s60
      %s75 = sphi 0, %s61
      %s79 = sphi 0, %s79
      %s81 = sphi 0, %s79
      %s82 = sphi 0, %s81
      %s96 = sphi 0, %s82
      %s100 = sphi 0, %s100
      %s102 = sphi 0, %s100
      %s103 = sphi 0, %s102
      %s117 = sphi 0, %s103
      %s121 = sphi 0, %s121
      %s123 = sphi 0, %s121
      %s124 = sphi 0, %s123
      %s138 = sphi 0, %s124
      %s142 = sphi 0, %s142
      %s144 = sphi 0, %s142
      %s145 = sphi 0, %s144
      %s159 = sphi 0, %s145
      %s163 = sphi 0, %s163
      %s165 = sphi 0, %s163
      %s166 = sphi 0, %s165
      %s180 = sphi 0, %s166
      %s184 = sphi 0, %s184
      %s186 = sphi 0, %s184
      %s187 = sphi 0, %s186
      %s201 = sphi 0, %s187
      %s205 = sphi 0, %s205
      %s207 = sphi 0, %s205
      %s208 = sphi 0, %s207
      %s222 = sphi 0, %s208
      %s226 = sphi 0, %s226
      %s228 = sphi 0, %s226
      %s229 = sphi 0, %s228
      %s243 = sphi 0, %s229
      %s247 = sphi 0, %s247
      %s249 = sphi 0, %s247
      %s250 = sphi 0, %s249
      %s264 = sphi 0, %s250
      %s268 = sphi 0, %s268
      %s270 = sphi 0, %s268
      %s271 = sphi 0, %s270
      %s285 = sphi 0, %s271
      %s289 = sphi 0, %s289
      %s291 = sphi 0, %s289
      %s292 = sphi 0, %s291
      %s306 = sphi 0, %s292
      %s310 = sphi 0, %s310
      %s312 = sphi 0, %s310
      %s313 = sphi 0, %s312
      %s327 = sphi 0, %s313
      %s331 = sphi 0, %s331
      %s333 = sphi 0, %s331
      %s334 = sphi 0, %s333
      %s348 = sphi 0, %s334
    $region4: #{tpu_custom_call.1} parent=1 // loop_header_branch
      %27 = sbr.rel (%p25) target = $region8
    $region5: #{tpu_custom_call.1} parent=1 // loop_body
      %s29 = ssub.s32 %s24, 1
      %s30 = ssub.s32 %s24, 2
      %s31 = sadd.s32 %s24, 1
      %s32 = ssub.s32 %s24, %s31
      %p33 = scmp.eq.s32.totalorder %s32, 0
      %s35 = sadd.s32 %s34, 1
      %s36 = scalar_select %p33, %s34, %s35
      %p39 = pneg %p33
      %p40 = scmp.eq.s32.totalorder %s24, 7
      %p41 = por %p39, %p40
      %p42 = scmp.ne.s32.totalorder %s34, %s37
      %p43 = scmp.eq.s32.totalorder %s24, 0
      %p44 = por %p42, %p43
      %p45 = scmp.ne.s32.totalorder %s34, %s37
      %p46 = scmp.eq.s32.totalorder %s29, 7
      %p47 = por %p45, %p46
      %p48 = scmp.ne.s32.totalorder %s37, %s38
      %p49 = scmp.eq.s32.totalorder %s29, 0
      %p50 = por %p48, %p49
      %p51 = scmp.ne.s32.totalorder %s37, %s38
      %p52 = scmp.eq.s32.totalorder %s30, 7
      %p53 = por %p51, %p52
      %p55 = scmp.ne.s32.totalorder %s38, %s54
      %p56 = scmp.eq.s32.totalorder %s30, 0
      %p57 = por %p55, %p56
      %s59 = sadd.s32 %s58, 1
      %p62 = scmp.eq.s32.totalorder %s24, 7
      %p63 = scmp.ne.s32.totalorder %s58, %s60
      %p64 = scmp.eq.s32.totalorder %s24, 0
      %p65 = por %p63, %p64
      %p66 = scmp.ne.s32.totalorder %s58, %s60
      %p67 = scmp.eq.s32.totalorder %s29, 7
      %p68 = por %p66, %p67
      %p69 = scmp.ne.s32.totalorder %s60, %s61
      %p70 = scmp.eq.s32.totalorder %s29, 0
      %p71 = por %p69, %p70
      %p72 = scmp.ne.s32.totalorder %s60, %s61
      %p73 = scmp.eq.s32.totalorder %s30, 7
      %p74 = por %p72, %p73
      %p76 = scmp.ne.s32.totalorder %s61, %s75
      %p77 = scmp.eq.s32.totalorder %s30, 0
      %p78 = por %p76, %p77
      %s80 = sadd.s32 %s79, 1
      %p83 = scmp.eq.s32.totalorder %s24, 7
      %p84 = scmp.ne.s32.totalorder %s79, %s81
      %p85 = scmp.eq.s32.totalorder %s24, 0
      %p86 = por %p84, %p85
      %p87 = scmp.ne.s32.totalorder %s79, %s81
      %p88 = scmp.eq.s32.totalorder %s29, 7
      %p89 = por %p87, %p88
      %p90 = scmp.ne.s32.totalorder %s81, %s82
      %p91 = scmp.eq.s32.totalorder %s29, 0
      %p92 = por %p90, %p91
      %p93 = scmp.ne.s32.totalorder %s81, %s82
      %p94 = scmp.eq.s32.totalorder %s30, 7
      %p95 = por %p93, %p94
      %p97 = scmp.ne.s32.totalorder %s82, %s96
      %p98 = scmp.eq.s32.totalorder %s30, 0
      %p99 = por %p97, %p98
      %s101 = sadd.s32 %s100, 1
      %p104 = scmp.eq.s32.totalorder %s24, 7
      %p105 = scmp.ne.s32.totalorder %s100, %s102
      %p106 = scmp.eq.s32.totalorder %s24, 0
      %p107 = por %p105, %p106
      %p108 = scmp.ne.s32.totalorder %s100, %s102
      %p109 = scmp.eq.s32.totalorder %s29, 7
      %p110 = por %p108, %p109
      %p111 = scmp.ne.s32.totalorder %s102, %s103
      %p112 = scmp.eq.s32.totalorder %s29, 0
      %p113 = por %p111, %p112
      %p114 = scmp.ne.s32.totalorder %s102, %s103
      %p115 = scmp.eq.s32.totalorder %s30, 7
      %p116 = por %p114, %p115
      %p118 = scmp.ne.s32.totalorder %s103, %s117
      %p119 = scmp.eq.s32.totalorder %s30, 0
      %p120 = por %p118, %p119
      %s122 = sadd.s32 %s121, 1
      %p125 = scmp.eq.s32.totalorder %s24, 7
      %p126 = scmp.ne.s32.totalorder %s121, %s123
      %p127 = scmp.eq.s32.totalorder %s24, 0
      %p128 = por %p126, %p127
      %p129 = scmp.ne.s32.totalorder %s121, %s123
      %p130 = scmp.eq.s32.totalorder %s29, 7
      %p131 = por %p129, %p130
      %p132 = scmp.ne.s32.totalorder %s123, %s124
      %p133 = scmp.eq.s32.totalorder %s29, 0
      %p134 = por %p132, %p133
      %p135 = scmp.ne.s32.totalorder %s123, %s124
      %p136 = scmp.eq.s32.totalorder %s30, 7
      %p137 = por %p135, %p136
      %p139 = scmp.ne.s32.totalorder %s124, %s138
      %p140 = scmp.eq.s32.totalorder %s30, 0
      %p141 = por %p139, %p140
      %s143 = sadd.s32 %s142, 1
      %p146 = scmp.eq.s32.totalorder %s24, 7
      %p147 = scmp.ne.s32.totalorder %s142, %s144
      %p148 = scmp.eq.s32.totalorder %s24, 0
      %p149 = por %p147, %p148
      %p150 = scmp.ne.s32.totalorder %s142, %s144
      %p151 = scmp.eq.s32.totalorder %s29, 7
      %p152 = por %p150, %p151
      %p153 = scmp.ne.s32.totalorder %s144, %s145
      %p154 = scmp.eq.s32.totalorder %s29, 0
      %p155 = por %p153, %p154
      %p156 = scmp.ne.s32.totalorder %s144, %s145
      %p157 = scmp.eq.s32.totalorder %s30, 7
      %p158 = por %p156, %p157
      %p160 = scmp.ne.s32.totalorder %s145, %s159
      %p161 = scmp.eq.s32.totalorder %s30, 0
      %p162 = por %p160, %p161
      %s164 = sadd.s32 %s163, 1
      %p167 = scmp.eq.s32.totalorder %s24, 7
      %p168 = scmp.ne.s32.totalorder %s163, %s165
      %p169 = scmp.eq.s32.totalorder %s24, 0
      %p170 = por %p168, %p169
      %p171 = scmp.ne.s32.totalorder %s163, %s165
      %p172 = scmp.eq.s32.totalorder %s29, 7
      %p173 = por %p171, %p172
      %p174 = scmp.ne.s32.totalorder %s165, %s166
      %p175 = scmp.eq.s32.totalorder %s29, 0
      %p176 = por %p174, %p175
      %p177 = scmp.ne.s32.totalorder %s165, %s166
      %p178 = scmp.eq.s32.totalorder %s30, 7
      %p179 = por %p177, %p178
      %p181 = scmp.ne.s32.totalorder %s166, %s180
      %p182 = scmp.eq.s32.totalorder %s30, 0
      %p183 = por %p181, %p182
      %s185 = sadd.s32 %s184, 1
      %p188 = scmp.eq.s32.totalorder %s24, 7
      %p189 = scmp.ne.s32.totalorder %s184, %s186
      %p190 = scmp.eq.s32.totalorder %s24, 0
      %p191 = por %p189, %p190
      %p192 = scmp.ne.s32.totalorder %s184, %s186
      %p193 = scmp.eq.s32.totalorder %s29, 7
      %p194 = por %p192, %p193
      %p195 = scmp.ne.s32.totalorder %s186, %s187
      %p196 = scmp.eq.s32.totalorder %s29, 0
      %p197 = por %p195, %p196
      %p198 = scmp.ne.s32.totalorder %s186, %s187
      %p199 = scmp.eq.s32.totalorder %s30, 7
      %p200 = por %p198, %p199
      %p202 = scmp.ne.s32.totalorder %s187, %s201
      %p203 = scmp.eq.s32.totalorder %s30, 0
      %p204 = por %p202, %p203
      %s206 = sadd.s32 %s205, 1
      %p209 = scmp.eq.s32.totalorder %s24, 7
      %p210 = scmp.ne.s32.totalorder %s205, %s207
      %p211 = scmp.eq.s32.totalorder %s24, 0
      %p212 = por %p210, %p211
      %p213 = scmp.ne.s32.totalorder %s205, %s207
      %p214 = scmp.eq.s32.totalorder %s29, 7
      %p215 = por %p213, %p214
      %p216 = scmp.ne.s32.totalorder %s207, %s208
      %p217 = scmp.eq.s32.totalorder %s29, 0
      %p218 = por %p216, %p217
      %p219 = scmp.ne.s32.totalorder %s207, %s208
      %p220 = scmp.eq.s32.totalorder %s30, 7
      %p221 = por %p219, %p220
      %p223 = scmp.ne.s32.totalorder %s208, %s222
      %p224 = scmp.eq.s32.totalorder %s30, 0
      %p225 = por %p223, %p224
      %s227 = sadd.s32 %s226, 1
      %p230 = scmp.eq.s32.totalorder %s24, 7
      %p231 = scmp.ne.s32.totalorder %s226, %s228
      %p232 = scmp.eq.s32.totalorder %s24, 0
      %p233 = por %p231, %p232
      %p234 = scmp.ne.s32.totalorder %s226, %s228
      %p235 = scmp.eq.s32.totalorder %s29, 7
      %p236 = por %p234, %p235
      %p237 = scmp.ne.s32.totalorder %s228, %s229
      %p238 = scmp.eq.s32.totalorder %s29, 0
      %p239 = por %p237, %p238
      %p240 = scmp.ne.s32.totalorder %s228, %s229
      %p241 = scmp.eq.s32.totalorder %s30, 7
      %p242 = por %p240, %p241
      %p244 = scmp.ne.s32.totalorder %s229, %s243
      %p245 = scmp.eq.s32.totalorder %s30, 0
      %p246 = por %p244, %p245
      %s248 = sadd.s32 %s247, 1
      %p251 = scmp.eq.s32.totalorder %s24, 7
      %p252 = scmp.ne.s32.totalorder %s247, %s249
      %p253 = scmp.eq.s32.totalorder %s24, 0
      %p254 = por %p252, %p253
      %p255 = scmp.ne.s32.totalorder %s247, %s249
      %p256 = scmp.eq.s32.totalorder %s29, 7
      %p257 = por %p255, %p256
      %p258 = scmp.ne.s32.totalorder %s249, %s250
      %p259 = scmp.eq.s32.totalorder %s29, 0
      %p260 = por %p258, %p259
      %p261 = scmp.ne.s32.totalorder %s249, %s250
      %p262 = scmp.eq.s32.totalorder %s30, 7
      %p263 = por %p261, %p262
      %p265 = scmp.ne.s32.totalorder %s250, %s264
      %p266 = scmp.eq.s32.totalorder %s30, 0
      %p267 = por %p265, %p266
      %s269 = sadd.s32 %s268, 1
      %p272 = scmp.eq.s32.totalorder %s24, 7
      %p273 = scmp.ne.s32.totalorder %s268, %s270
      %p274 = scmp.eq.s32.totalorder %s24, 0
      %p275 = por %p273, %p274
      %p276 = scmp.ne.s32.totalorder %s268, %s270
      %p277 = scmp.eq.s32.totalorder %s29, 7
      %p278 = por %p276, %p277
      %p279 = scmp.ne.s32.totalorder %s270, %s271
      %p280 = scmp.eq.s32.totalorder %s29, 0
      %p281 = por %p279, %p280
      %p282 = scmp.ne.s32.totalorder %s270, %s271
      %p283 = scmp.eq.s32.totalorder %s30, 7
      %p284 = por %p282, %p283
      %p286 = scmp.ne.s32.totalorder %s271, %s285
      %p287 = scmp.eq.s32.totalorder %s30, 0
      %p288 = por %p286, %p287
      %s290 = sadd.s32 %s289, 1
      %p293 = scmp.eq.s32.totalorder %s24, 7
      %p294 = scmp.ne.s32.totalorder %s289, %s291
      %p295 = scmp.eq.s32.totalorder %s24, 0
      %p296 = por %p294, %p295
      %p297 = scmp.ne.s32.totalorder %s289, %s291
      %p298 = scmp.eq.s32.totalorder %s29, 7
      %p299 = por %p297, %p298
      %p300 = scmp.ne.s32.totalorder %s291, %s292
      %p301 = scmp.eq.s32.totalorder %s29, 0
      %p302 = por %p300, %p301
      %p303 = scmp.ne.s32.totalorder %s291, %s292
      %p304 = scmp.eq.s32.totalorder %s30, 7
      %p305 = por %p303, %p304
      %p307 = scmp.ne.s32.totalorder %s292, %s306
      %p308 = scmp.eq.s32.totalorder %s30, 0
      %p309 = por %p307, %p308
      %s311 = sadd.s32 %s310, 1
      %p314 = scmp.eq.s32.totalorder %s24, 7
      %p315 = scmp.ne.s32.totalorder %s310, %s312
      %p316 = scmp.eq.s32.totalorder %s24, 0
      %p317 = por %p315, %p316
      %p318 = scmp.ne.s32.totalorder %s310, %s312
      %p319 = scmp.eq.s32.totalorder %s29, 7
      %p320 = por %p318, %p319
      %p321 = scmp.ne.s32.totalorder %s312, %s313
      %p322 = scmp.eq.s32.totalorder %s29, 0
      %p323 = por %p321, %p322
      %p324 = scmp.ne.s32.totalorder %s312, %s313
      %p325 = scmp.eq.s32.totalorder %s30, 7
      %p326 = por %p324, %p325
      %p328 = scmp.ne.s32.totalorder %s313, %s327
      %p329 = scmp.eq.s32.totalorder %s30, 0
      %p330 = por %p328, %p329
      %s332 = sadd.s32 %s331, 1
      %p335 = scmp.eq.s32.totalorder %s24, 7
      %p336 = scmp.ne.s32.totalorder %s331, %s333
      %p337 = scmp.eq.s32.totalorder %s24, 0
      %p338 = por %p336, %p337
      %p339 = scmp.ne.s32.totalorder %s331, %s333
      %p340 = scmp.eq.s32.totalorder %s29, 7
      %p341 = por %p339, %p340
      %p342 = scmp.ne.s32.totalorder %s333, %s334
      %p343 = scmp.eq.s32.totalorder %s29, 0
      %p344 = por %p342, %p343
      %p345 = scmp.ne.s32.totalorder %s333, %s334
      %p346 = scmp.eq.s32.totalorder %s30, 7
      %p347 = por %p345, %p346
      %p349 = scmp.ne.s32.totalorder %s334, %s348
      %p350 = scmp.eq.s32.totalorder %s30, 0
      %p351 = por %p349, %p350
      %p352 = scmp.le.s32.totalorder 1, %s24
      %p353 = scmp.lt.s32.totalorder %s24, 9
      %p354 = pnand %p352, %p353
      %p355 = pneg %p354
      // Predicated region
      $region9: #{tpu_custom_call.1} parent=5 // pred_check
        _
      $region10: #{tpu_custom_call.1} parent=5 // pred_check_branch
        %357 = sbr.rel (%p354) target = $region12
      $region11: #{tpu_custom_call.1} parent=5 // pred_region
        %s358 = ssub.s32 %s24, 1
        // Predicated region
        $region13: #{tpu_custom_call.1} parent=11 // pred_check
          %p359 = pneg %p71
        $region14: #{tpu_custom_call.1} parent=11 // pred_check_branch
          %361 = sbr.rel (%p359) target = $region16
        $region15: #{tpu_custom_call.1} parent=11 // pred_region
          _
        $region16: #{tpu_custom_call.1} parent=11 // pred_fallthru
          _
        // Predicated region
        $region17: #{tpu_custom_call.1} parent=11 // pred_check
          %p362 = pneg %p92
        $region18: #{tpu_custom_call.1} parent=11 // pred_check_branch
          %364 = sbr.rel (%p362) target = $region20
        $region19: #{tpu_custom_call.1} parent=11 // pred_region
          _
        $region20: #{tpu_custom_call.1} parent=11 // pred_fallthru
          _
        // Predicated region
        $region21: #{tpu_custom_call.1} parent=11 // pred_check
          %p365 = pneg %p113
        $region22: #{tpu_custom_call.1} parent=11 // pred_check_branch
          %367 = sbr.rel (%p365) target = $region24
        $region23: #{tpu_custom_call.1} parent=11 // pred_region
          _
        $region24: #{tpu_custom_call.1} parent=11 // pred_fallthru
          _
        // Predicated region
        $region25: #{tpu_custom_call.1} parent=11 // pred_check
          %p368 = pneg %p134
        $region26: #{tpu_custom_call.1} parent=11 // pred_check_branch
          %370 = sbr.rel (%p368) target = $region28
        $region27: #{tpu_custom_call.1} parent=11 // pred_region
          _
        $region28: #{tpu_custom_call.1} parent=11 // pred_fallthru
          _
        // Predicated region
        $region29: #{tpu_custom_call.1} parent=11 // pred_check
          %p371 = pneg %p155
        $region30: #{tpu_custom_call.1} parent=11 // pred_check_branch
          %373 = sbr.rel (%p371) target = $region32
        $region31: #{tpu_custom_call.1} parent=11 // pred_region
          _
        $region32: #{tpu_custom_call.1} parent=11 // pred_fallthru
          _
        // Predicated region
        $region33: #{tpu_custom_call.1} parent=11 // pred_check
          %p374 = pneg %p176
        $region34: #{tpu_custom_call.1} parent=11 // pred_check_branch
          %376 = sbr.rel (%p374) target = $region36
        $region35: #{tpu_custom_call.1} parent=11 // pred_region
          _
        $region36: #{tpu_custom_call.1} parent=11 // pred_fallthru
          _
        // Predicated region
        $region37: #{tpu_custom_call.1} parent=11 // pred_check
          %p377 = pneg %p197
        $region38: #{tpu_custom_call.1} parent=11 // pred_check_branch
          %379 = sbr.rel (%p377) target = $region40
        $region39: #{tpu_custom_call.1} parent=11 // pred_region
          %s381 = ssub.s32 3072, 3072
          %382 = vsyncadd [#allocation5], %s381
          %s383 = sshll.u32 [#allocation4], 4
          %s384 = int_to_ptr.vmem [resolvable:$true] %s383
          %389 = dma.hbm_to_vmem [thread:$0]  %s7, 3072, %s384, [#allocation5], 128, 128, 8
        $region40: #{tpu_custom_call.1} parent=11 // pred_fallthru
          _
        // Predicated region
        $region41: #{tpu_custom_call.1} parent=11 // pred_check
          %p390 = pneg %p218
        $region42: #{tpu_custom_call.1} parent=11 // pred_check_branch
          %392 = sbr.rel (%p390) target = $region44
        $region43: #{tpu_custom_call.1} parent=11 // pred_region
          %s394 = ssub.s32 3072, 3072
          %395 = vsyncadd [#allocation8], %s394
          %s396 = sshll.u32 [#allocation7], 4
          %s397 = int_to_ptr.vmem [resolvable:$true] %s396
          %402 = dma.hbm_to_vmem [thread:$0]  %s8, 3072, %s397, [#allocation8], 128, 128, 8
        $region44: #{tpu_custom_call.1} parent=11 // pred_fallthru
          _
        // Predicated region
        $region45: #{tpu_custom_call.1} parent=11 // pred_check
          %p403 = pneg %p239
        $region46: #{tpu_custom_call.1} parent=11 // pred_check_branch
          %405 = sbr.rel (%p403) target = $region48
        $region47: #{tpu_custom_call.1} parent=11 // pred_region
          _
        $region48: #{tpu_custom_call.1} parent=11 // pred_fallthru
          _
        // Predicated region
        $region49: #{tpu_custom_call.1} parent=11 // pred_check
          %p406 = pneg %p260
        $region50: #{tpu_custom_call.1} parent=11 // pred_check_branch
          %408 = sbr.rel (%p406) target = $region52
        $region51: #{tpu_custom_call.1} parent=11 // pred_region
          _
        $region52: #{tpu_custom_call.1} parent=11 // pred_fallthru
          _
        // Predicated region
        $region53: #{tpu_custom_call.1} parent=11 // pred_check
          %p409 = pneg %p281
        $region54: #{tpu_custom_call.1} parent=11 // pred_check_branch
          %411 = sbr.rel (%p409) target = $region56
        $region55: #{tpu_custom_call.1} parent=11 // pred_region
          _
        $region56: #{tpu_custom_call.1} parent=11 // pred_fallthru
          _
        // Predicated region
        $region57: #{tpu_custom_call.1} parent=11 // pred_check
          %p412 = pneg %p302
        $region58: #{tpu_custom_call.1} parent=11 // pred_check_branch
          %414 = sbr.rel (%p412) target = $region60
        $region59: #{tpu_custom_call.1} parent=11 // pred_region
          _
        $region60: #{tpu_custom_call.1} parent=11 // pred_fallthru
          _
      $region12: #{tpu_custom_call.1} parent=5 // pred_fallthru
        _
      %p415 = scmp.lt.s32.totalorder %s24, 8
      // Predicated region
      $region61: #{tpu_custom_call.1} parent=5 // pred_check
        %p416 = pneg %p415
      $region62: #{tpu_custom_call.1} parent=5 // pred_check_branch
        %418 = sbr.rel (%p416) target = $region64
      $region63: #{tpu_custom_call.1} parent=5 // pred_region
        // Predicated region
        $region65: #{tpu_custom_call.1} parent=63 // pred_check
          %p419 = pneg %p44
        $region66: #{tpu_custom_call.1} parent=63 // pred_check_branch
          %421 = sbr.rel (%p419) target = $region68
        $region67: #{tpu_custom_call.1} parent=63 // pred_region
          %p422 = scmp.lt.s32.totalorder %s24, 7
          %s423 = scalar_select %p422, %s24, 7
          %s424 = scalar_lea.vmem %s0, %s423
        $region68: #{tpu_custom_call.1} parent=63 // pred_fallthru
          _
      $region64: #{tpu_custom_call.1} parent=5 // pred_fallthru
        _
      %p425 = scmp.le.s32.totalorder 1, %s24
      %p426 = scmp.lt.s32.totalorder %s24, 9
      %p427 = pnand %p425, %p426
      %p428 = pneg %p427
      // Predicated region
      $region69: #{tpu_custom_call.1} parent=5 // pred_check
        _
      $region70: #{tpu_custom_call.1} parent=5 // pred_check_branch
        %430 = sbr.rel (%p427) target = $region72
      $region71: #{tpu_custom_call.1} parent=5 // pred_region
        %s431 = ssub.s32 %s24, 1
        // Predicated region
        $region73: #{tpu_custom_call.1} parent=71 // pred_check
          %p432 = pneg %p197
        $region74: #{tpu_custom_call.1} parent=71 // pred_check_branch
          %434 = sbr.rel (%p432) target = $region76
        $region75: #{tpu_custom_call.1} parent=71 // pred_region
          %435 = dma.done [#allocation5], 3072
        $region76: #{tpu_custom_call.1} parent=71 // pred_fallthru
          _
        // Predicated region
        $region77: #{tpu_custom_call.1} parent=71 // pred_check
          %p436 = pneg %p218
        $region78: #{tpu_custom_call.1} parent=71 // pred_check_branch
          %438 = sbr.rel (%p436) target = $region80
        $region79: #{tpu_custom_call.1} parent=71 // pred_region
          %439 = dma.done [#allocation8], 3072
        $region80: #{tpu_custom_call.1} parent=71 // pred_fallthru
          _
        %p440 = scmp.lt.s32.totalorder %s29, 7
        %s441 = scalar_select %p440, %s29, 7
        %s442 = scalar_lea.vmem %s0, %s441
        %p443 = pneg %p50
        %p444 = pneg %p47
        %p445 = pneg %p71
        %p446 = pneg %p68
        %p447 = pneg %p92
        %p448 = pneg %p89
        %p449 = pneg %p113
        %p450 = pneg %p110
        %p451 = pneg %p134
        %p452 = pneg %p131
        %p453 = pneg %p155
        %p454 = pneg %p152
        %p455 = pneg %p176
        %p456 = pneg %p173
        %p457 = pneg %p197
        %p458 = pneg %p194
        %p459 = pneg %p218
        %p460 = pneg %p215
        %p461 = pneg %p239
        %p462 = pneg %p236
        %p463 = pneg %p260
        %p464 = pneg %p257
        %p465 = pneg %p281
        %p466 = pneg %p278
        %p467 = pneg %p302
        %p468 = pneg %p299
        %p469 = pneg %p323
        %p470 = pneg %p320
        %p471 = pneg %p344
        %p472 = pneg %p341
        %p473 = scmp.lt.s32.totalorder %s29, 7
        %s474 = scalar_select %p473, %s29, 7
        %s475 = scalar_lea.vmem %s0, %s474
        %p476 = scmp.eq.s32.totalorder %s29, 0
        // Predicated region
        $region81: #{tpu_custom_call.1} parent=71 // pred_check
          %p477 = pneg %p476
        $region82: #{tpu_custom_call.1} parent=71 // pred_check_branch
          %479 = sbr.rel (%p477) target = $region84
        $region83: #{tpu_custom_call.1} parent=71 // pred_region
          %v480 = vld [vmem:[%s1] sm:$0x1]
          %vm481 = vcmask 24576
          %482 = vst.msk [vmem:[#allocation2] sm:$0x1] %vm481, %v480
          %v483 = vld [vmem:[%s2] sm:$0x1]
          %v484 = vld [vmem:[%s2 + $0x1] sm:$0x1]
          %vm485 = vcmask 253952
          %486 = vst.msk [vmem:[#allocation3] sm:$0x1] %vm485, %v483
          %487 = vst.msk [vmem:[#allocation3 + $0x1] sm:$0x1] %vm485, %v484
        $region84: #{tpu_custom_call.1} parent=71 // pred_fallthru
          _
        %v488 = vld [vmem:[#allocation2] sm:$0x1]
        %v489 = vld [vmem:[%s475] sm:$0x1]
        %v490 = vld [vmem:[%s4] sm:$0xf]
        %v491 = vld [vmem:[%s5] sm:$0xf]
        %vm492 = vcmask 31744
        %v494 = vsel %vm492, %v489, 0
        %vm496 = vcmask 1043456
        %v498 = vsel %vm496, %v491, 0
        %500 = vmatprep.subr.mxu0 0.0
        %501 = vmatpush1.msra.mxu0 %v498
        %502 = vmatprep.subr.mxu0 0.0
        %503 = vmatpush1.msra.mxu0 0.0
        %504 = vmatprep.subr.mxu0 0.0
        %505 = vmatpush1.msra.mxu0 0.0
        %506 = vmatprep.subr.mxu0 0.0
        %507 = vmatpush1.msra.mxu0 0.0
        %508 = vmatprep.subr.mxu0 0.0
        %509 = vmatpush1.msra.mxu0 0.0
        %510 = vmatprep.subr.mxu0 0.0
        %511 = vmatpush1.msra.mxu0 0.0
        %512 = vmatprep.subr.mxu0 0.0
        %513 = vmatpush1.msra.mxu0 0.0
        %514 = vmatprep.subr.mxu0 0.0
        %515 = vmatpush1.msra.mxu0 0.0
        %516 = vmatprep.subr.mxu0 0.0
        %517 = vmatpush1.msra.mxu0 0.0
        %518 = vmatprep.subr.mxu0 0.0
        %519 = vmatpush1.msra.mxu0 0.0
        %520 = vmatprep.subr.mxu0 0.0
        %521 = vmatpush1.msra.mxu0 0.0
        %522 = vmatprep.subr.mxu0 0.0
        %523 = vmatpush1.msra.mxu0 0.0
        %524 = vmatprep.subr.mxu0 0.0
        %525 = vmatpush1.msra.mxu0 0.0
        %526 = vmatprep.subr.mxu0 0.0
        %527 = vmatpush1.msra.mxu0 0.0
        %528 = vmatprep.subr.mxu0 0.0
        %529 = vmatpush1.msra.mxu0 0.0
        %530 = vmatprep.subr.mxu0 0.0
        %531 = vmatpush1.msra.mxu0 0.0
        %532 = vmatprep.subr.mxu0 0.0
        %533 = vmatpush1.msra.mxu0 0.0
        %534 = vmatprep.subr.mxu0 0.0
        %535 = vmatpush1.msra.mxu0 0.0
        %536 = vmatprep.subr.mxu0 0.0
        %537 = vmatpush1.msra.mxu0 0.0
        %538 = vmatprep.subr.mxu0 0.0
        %539 = vmatpush1.msra.mxu0 0.0
        %540 = vmatprep.subr.mxu0 0.0
        %541 = vmatpush1.msra.mxu0 0.0
        %542 = vmatprep.subr.mxu0 0.0
        %543 = vmatpush1.msra.mxu0 0.0
        %544 = vmatprep.subr.mxu0 0.0
        %545 = vmatpush1.msra.mxu0 0.0
        %546 = vmatprep.subr.mxu0 0.0
        %547 = vmatpush1.msra.mxu0 0.0
        %548 = vmatprep.subr.mxu0 0.0
        %549 = vmatpush1.msra.mxu0 0.0
        %550 = vmatprep.subr.mxu0 0.0
        %551 = vmatpush1.msra.mxu0 0.0
        %552 = vmatprep.subr.mxu0 0.0
        %553 = vmatpush1.msra.mxu0 0.0
        %554 = vmatprep.subr.mxu0 0.0
        %555 = vmatpush1.msra.mxu0 0.0
        %556 = vmatprep.subr.mxu0 0.0
        %557 = vmatpush1.msra.mxu0 0.0
        %558 = vmatprep.subr.mxu0 0.0
        %559 = vmatpush1.msra.mxu0 0.0
        %560 = vmatprep.subr.mxu0 0.0
        %561 = vmatpush1.msra.mxu0 0.0
        %562 = vmatprep.subr.mxu0 0.0
        %563 = vmatpush1.msra.mxu0 0.0
        %564 = vmatprep.mubr.f32.mxu0 0.0
        %565 = vmatmul.mubr.f32.gmra.mrb[0].mxu0 %v494
        %v566 = vpop.f32.mrb[0].mxu0
        %v567 = vadd.f32 0.0, %v566
        %v568 = vpop.f32.mrb[0].mxu0
        %569 = vdwg.mxu0
        %v571 = vsel %vm492, %v488, 0
        %v574 = vsel %vm496, %v490, 0
        %576 = vmatprep.subr.mxu0 0.0
        %577 = vmatpush1.msra.mxu0 %v574
        %578 = vmatprep.subr.mxu0 0.0
        %579 = vmatpush1.msra.mxu0 0.0
        %580 = vmatprep.subr.mxu0 0.0
        %581 = vmatpush1.msra.mxu0 0.0
        %582 = vmatprep.subr.mxu0 0.0
        %583 = vmatpush1.msra.mxu0 0.0
        %584 = vmatprep.subr.mxu0 0.0
        %585 = vmatpush1.msra.mxu0 0.0
        %586 = vmatprep.subr.mxu0 0.0
        %587 = vmatpush1.msra.mxu0 0.0
        %588 = vmatprep.subr.mxu0 0.0
        %589 = vmatpush1.msra.mxu0 0.0
        %590 = vmatprep.subr.mxu0 0.0
        %591 = vmatpush1.msra.mxu0 0.0
        %592 = vmatprep.subr.mxu0 0.0
        %593 = vmatpush1.msra.mxu0 0.0
        %594 = vmatprep.subr.mxu0 0.0
        %595 = vmatpush1.msra.mxu0 0.0
        %596 = vmatprep.subr.mxu0 0.0
        %597 = vmatpush1.msra.mxu0 0.0
        %598 = vmatprep.subr.mxu0 0.0
        %599 = vmatpush1.msra.mxu0 0.0
        %600 = vmatprep.subr.mxu0 0.0
        %601 = vmatpush1.msra.mxu0 0.0
        %602 = vmatprep.subr.mxu0 0.0
        %603 = vmatpush1.msra.mxu0 0.0
        %604 = vmatprep.subr.mxu0 0.0
        %605 = vmatpush1.msra.mxu0 0.0
        %606 = vmatprep.subr.mxu0 0.0
        %607 = vmatpush1.msra.mxu0 0.0
        %608 = vmatprep.subr.mxu0 0.0
        %609 = vmatpush1.msra.mxu0 0.0
        %610 = vmatprep.subr.mxu0 0.0
        %611 = vmatpush1.msra.mxu0 0.0
        %612 = vmatprep.subr.mxu0 0.0
        %613 = vmatpush1.msra.mxu0 0.0
        %614 = vmatprep.subr.mxu0 0.0
        %615 = vmatpush1.msra.mxu0 0.0
        %616 = vmatprep.subr.mxu0 0.0
        %617 = vmatpush1.msra.mxu0 0.0
        %618 = vmatprep.subr.mxu0 0.0
        %619 = vmatpush1.msra.mxu0 0.0
        %620 = vmatprep.subr.mxu0 0.0
        %621 = vmatpush1.msra.mxu0 0.0
        %622 = vmatprep.subr.mxu0 0.0
        %623 = vmatpush1.msra.mxu0 0.0
        %624 = vmatprep.subr.mxu0 0.0
        %625 = vmatpush1.msra.mxu0 0.0
        %626 = vmatprep.subr.mxu0 0.0
        %627 = vmatpush1.msra.mxu0 0.0
        %628 = vmatprep.subr.mxu0 0.0
        %629 = vmatpush1.msra.mxu0 0.0
        %630 = vmatprep.subr.mxu0 0.0
        %631 = vmatpush1.msra.mxu0 0.0
        %632 = vmatprep.subr.mxu0 0.0
        %633 = vmatpush1.msra.mxu0 0.0
        %634 = vmatprep.subr.mxu0 0.0
        %635 = vmatpush1.msra.mxu0 0.0
        %636 = vmatprep.subr.mxu0 0.0
        %637 = vmatpush1.msra.mxu0 0.0
        %638 = vmatprep.subr.mxu0 0.0
        %639 = vmatpush1.msra.mxu0 0.0
        %640 = vmatprep.mubr.f32.mxu0 0.0
        %641 = vmatmul.mubr.f32.gmra.mrb[0].mxu0 %v571
        %v642 = vpop.f32.mrb[0].mxu0
        %v643 = vadd.f32 %v567, %v642
        %v644 = vpop.f32.mrb[0].mxu0
        %645 = vdwg.mxu0
        %v646 = vld [vmem:[%s6] sm:$0x1]
        %v647 = vadd.f32 %v643, %v646
        %v648 = vmax.f32 %v647, 0.0
        %v649 = vld [vmem:[#allocation3] sm:$0x1]
        %v650 = vld [vmem:[#allocation4] sm:$0xff]
        %v651 = vld [vmem:[#allocation4 + $0x8] sm:$0xff]
        %v652 = vld [vmem:[#allocation4 + $0x10] sm:$0xff]
        %v653 = vld [vmem:[#allocation4 + $0x18] sm:$0xff]
        %v654 = vld [vmem:[%s9] sm:$0x1]
        %vm655 = vcmask 261120
        %v657 = vsel %vm655, %v648, 0
        %659 = vmatprep.subr.mxu0 0.0
        %660 = vmatpush1.msra.mxu0 %v650
        %661 = vmatprep.subr.mxu0 0.0
        %662 = vmatpush1.msra.mxu0 %v651
        %663 = vmatprep.subr.mxu0 0.0
        %664 = vmatpush1.msra.mxu0 %v652
        %665 = vmatprep.subr.mxu0 0.0
        %666 = vmatpush1.msra.mxu0 %v653
        %667 = vmatprep.subr.mxu0 0.0
        %668 = vmatpush1.msra.mxu0 0.0
        %669 = vmatprep.subr.mxu0 0.0
        %670 = vmatpush1.msra.mxu0 0.0
        %671 = vmatprep.subr.mxu0 0.0
        %672 = vmatpush1.msra.mxu0 0.0
        %673 = vmatprep.subr.mxu0 0.0
        %674 = vmatpush1.msra.mxu0 0.0
        %675 = vmatprep.subr.mxu0 0.0
        %676 = vmatpush1.msra.mxu0 0.0
        %677 = vmatprep.subr.mxu0 0.0
        %678 = vmatpush1.msra.mxu0 0.0
        %679 = vmatprep.subr.mxu0 0.0
        %680 = vmatpush1.msra.mxu0 0.0
        %681 = vmatprep.subr.mxu0 0.0
        %682 = vmatpush1.msra.mxu0 0.0
        %683 = vmatprep.subr.mxu0 0.0
        %684 = vmatpush1.msra.mxu0 0.0
        %685 = vmatprep.subr.mxu0 0.0
        %686 = vmatpush1.msra.mxu0 0.0
        %687 = vmatprep.subr.mxu0 0.0
        %688 = vmatpush1.msra.mxu0 0.0
        %689 = vmatprep.subr.mxu0 0.0
        %690 = vmatpush1.msra.mxu0 0.0
        %691 = vmatprep.subr.mxu0 0.0
        %692 = vmatpush1.msra.mxu0 0.0
        %693 = vmatprep.subr.mxu0 0.0
        %694 = vmatpush1.msra.mxu0 0.0
        %695 = vmatprep.subr.mxu0 0.0
        %696 = vmatpush1.msra.mxu0 0.0
        %697 = vmatprep.subr.mxu0 0.0
        %698 = vmatpush1.msra.mxu0 0.0
        %699 = vmatprep.subr.mxu0 0.0
        %700 = vmatpush1.msra.mxu0 0.0
        %701 = vmatprep.subr.mxu0 0.0
        %702 = vmatpush1.msra.mxu0 0.0
        %703 = vmatprep.subr.mxu0 0.0
        %704 = vmatpush1.msra.mxu0 0.0
        %705 = vmatprep.subr.mxu0 0.0
        %706 = vmatpush1.msra.mxu0 0.0
        %707 = vmatprep.subr.mxu0 0.0
        %708 = vmatpush1.msra.mxu0 0.0
        %709 = vmatprep.subr.mxu0 0.0
        %710 = vmatpush1.msra.mxu0 0.0
        %711 = vmatprep.subr.mxu0 0.0
        %712 = vmatpush1.msra.mxu0 0.0
        %713 = vmatprep.subr.mxu0 0.0
        %714 = vmatpush1.msra.mxu0 0.0
        %715 = vmatprep.subr.mxu0 0.0
        %716 = vmatpush1.msra.mxu0 0.0
        %717 = vmatprep.subr.mxu0 0.0
        %718 = vmatpush1.msra.mxu0 0.0
        %719 = vmatprep.subr.mxu0 0.0
        %720 = vmatpush1.msra.mxu0 0.0
        %721 = vmatprep.subr.mxu0 0.0
        %722 = vmatpush1.msra.mxu0 0.0
        %723 = vmatprep.mubr.f32.mxu0 0.0
        %724 = vmatmul.mubr.f32.gmra.mrb[0].mxu0 %v657
        %v725 = vpop.f32.mrb[0].mxu0
        %v726 = vadd.f32 %v654, %v725
        %v727 = vpop.f32.mrb[0].mxu0
        %728 = vdwg.mxu0
        %s729 = scalar_lea.vmem [#allocation4], 32
        %v730 = vld [vmem:[%s729] sm:$0xff]
        %v731 = vld [vmem:[%s729 + $0x8] sm:$0xff]
        %v732 = vld [vmem:[%s729 + $0x10] sm:$0xff]
        %v733 = vld [vmem:[%s729 + $0x18] sm:$0xff]
        %s734 = scalar_lea.vmem %s9, 1
        %v735 = vld [vmem:[%s734] sm:$0x1]
        %736 = vmatprep.subr.mxu0 0.0
        %737 = vmatpush1.msra.mxu0 %v730
        %738 = vmatprep.subr.mxu0 0.0
        %739 = vmatpush1.msra.mxu0 %v731
        %740 = vmatprep.subr.mxu0 0.0
        %741 = vmatpush1.msra.mxu0 %v732
        %742 = vmatprep.subr.mxu0 0.0
        %743 = vmatpush1.msra.mxu0 %v733
        %744 = vmatprep.subr.mxu0 0.0
        %745 = vmatpush1.msra.mxu0 0.0
        %746 = vmatprep.subr.mxu0 0.0
        %747 = vmatpush1.msra.mxu0 0.0
        %748 = vmatprep.subr.mxu0 0.0
        %749 = vmatpush1.msra.mxu0 0.0
        %750 = vmatprep.subr.mxu0 0.0
        %751 = vmatpush1.msra.mxu0 0.0
        %752 = vmatprep.subr.mxu0 0.0
        %753 = vmatpush1.msra.mxu0 0.0
        %754 = vmatprep.subr.mxu0 0.0
        %755 = vmatpush1.msra.mxu0 0.0
        %756 = vmatprep.subr.mxu0 0.0
        %757 = vmatpush1.msra.mxu0 0.0
        %758 = vmatprep.subr.mxu0 0.0
        %759 = vmatpush1.msra.mxu0 0.0
        %760 = vmatprep.subr.mxu0 0.0
        %761 = vmatpush1.msra.mxu0 0.0
        %762 = vmatprep.subr.mxu0 0.0
        %763 = vmatpush1.msra.mxu0 0.0
        %764 = vmatprep.subr.mxu0 0.0
        %765 = vmatpush1.msra.mxu0 0.0
        %766 = vmatprep.subr.mxu0 0.0
        %767 = vmatpush1.msra.mxu0 0.0
        %768 = vmatprep.subr.mxu0 0.0
        %769 = vmatpush1.msra.mxu0 0.0
        %770 = vmatprep.subr.mxu0 0.0
        %771 = vmatpush1.msra.mxu0 0.0
        %772 = vmatprep.subr.mxu0 0.0
        %773 = vmatpush1.msra.mxu0 0.0
        %774 = vmatprep.subr.mxu0 0.0
        %775 = vmatpush1.msra.mxu0 0.0
        %776 = vmatprep.subr.mxu0 0.0
        %777 = vmatpush1.msra.mxu0 0.0
        %778 = vmatprep.subr.mxu0 0.0
        %779 = vmatpush1.msra.mxu0 0.0
        %780 = vmatprep.subr.mxu0 0.0
        %781 = vmatpush1.msra.mxu0 0.0
        %782 = vmatprep.subr.mxu0 0.0
        %783 = vmatpush1.msra.mxu0 0.0
        %784 = vmatprep.subr.mxu0 0.0
        %785 = vmatpush1.msra.mxu0 0.0
        %786 = vmatprep.subr.mxu0 0.0
        %787 = vmatpush1.msra.mxu0 0.0
        %788 = vmatprep.subr.mxu0 0.0
        %789 = vmatpush1.msra.mxu0 0.0
        %790 = vmatprep.subr.mxu0 0.0
        %791 = vmatpush1.msra.mxu0 0.0
        %792 = vmatprep.subr.mxu0 0.0
        %793 = vmatpush1.msra.mxu0 0.0
        %794 = vmatprep.subr.mxu0 0.0
        %795 = vmatpush1.msra.mxu0 0.0
        %796 = vmatprep.subr.mxu0 0.0
        %797 = vmatpush1.msra.mxu0 0.0
        %798 = vmatprep.subr.mxu0 0.0
        %799 = vmatpush1.msra.mxu0 0.0
        %800 = vmatprep.mubr.f32.mxu0 0.0
        %801 = vmatmul.mubr.f32.gmra.mrb[0].mxu0 %v657
        %v802 = vpop.f32.mrb[0].mxu0
        %v803 = vadd.f32 %v735, %v802
        %v804 = vpop.f32.mrb[0].mxu0
        %805 = vdwg.mxu0
        %s806 = scalar_lea.vmem [#allocation4], 64
        %v807 = vld [vmem:[%s806] sm:$0xff]
        %v808 = vld [vmem:[%s806 + $0x8] sm:$0xff]
        %v809 = vld [vmem:[%s806 + $0x10] sm:$0xff]
        %v810 = vld [vmem:[%s806 + $0x18] sm:$0xff]
        %s811 = scalar_lea.vmem %s9, 2
        %v812 = vld [vmem:[%s811] sm:$0x1]
        %813 = vmatprep.subr.mxu0 0.0
        %814 = vmatpush1.msra.mxu0 %v807
        %815 = vmatprep.subr.mxu0 0.0
        %816 = vmatpush1.msra.mxu0 %v808
        %817 = vmatprep.subr.mxu0 0.0
        %818 = vmatpush1.msra.mxu0 %v809
        %819 = vmatprep.subr.mxu0 0.0
        %820 = vmatpush1.msra.mxu0 %v810
        %821 = vmatprep.subr.mxu0 0.0
        %822 = vmatpush1.msra.mxu0 0.0
        %823 = vmatprep.subr.mxu0 0.0
        %824 = vmatpush1.msra.mxu0 0.0
        %825 = vmatprep.subr.mxu0 0.0
        %826 = vmatpush1.msra.mxu0 0.0
        %827 = vmatprep.subr.mxu0 0.0
        %828 = vmatpush1.msra.mxu0 0.0
        %829 = vmatprep.subr.mxu0 0.0
        %830 = vmatpush1.msra.mxu0 0.0
        %831 = vmatprep.subr.mxu0 0.0
        %832 = vmatpush1.msra.mxu0 0.0
        %833 = vmatprep.subr.mxu0 0.0
        %834 = vmatpush1.msra.mxu0 0.0
        %835 = vmatprep.subr.mxu0 0.0
        %836 = vmatpush1.msra.mxu0 0.0
        %837 = vmatprep.subr.mxu0 0.0
        %838 = vmatpush1.msra.mxu0 0.0
        %839 = vmatprep.subr.mxu0 0.0
        %840 = vmatpush1.msra.mxu0 0.0
        %841 = vmatprep.subr.mxu0 0.0
        %842 = vmatpush1.msra.mxu0 0.0
        %843 = vmatprep.subr.mxu0 0.0
        %844 = vmatpush1.msra.mxu0 0.0
        %845 = vmatprep.subr.mxu0 0.0
        %846 = vmatpush1.msra.mxu0 0.0
        %847 = vmatprep.subr.mxu0 0.0
        %848 = vmatpush1.msra.mxu0 0.0
        %849 = vmatprep.subr.mxu0 0.0
        %850 = vmatpush1.msra.mxu0 0.0
        %851 = vmatprep.subr.mxu0 0.0
        %852 = vmatpush1.msra.mxu0 0.0
        %853 = vmatprep.subr.mxu0 0.0
        %854 = vmatpush1.msra.mxu0 0.0
        %855 = vmatprep.subr.mxu0 0.0
        %856 = vmatpush1.msra.mxu0 0.0
        %857 = vmatprep.subr.mxu0 0.0
        %858 = vmatpush1.msra.mxu0 0.0
        %859 = vmatprep.subr.mxu0 0.0
        %860 = vmatpush1.msra.mxu0 0.0
        %861 = vmatprep.subr.mxu0 0.0
        %862 = vmatpush1.msra.mxu0 0.0
        %863 = vmatprep.subr.mxu0 0.0
        %864 = vmatpush1.msra.mxu0 0.0
        %865 = vmatprep.subr.mxu0 0.0
        %866 = vmatpush1.msra.mxu0 0.0
        %867 = vmatprep.subr.mxu0 0.0
        %868 = vmatpush1.msra.mxu0 0.0
        %869 = vmatprep.subr.mxu0 0.0
        %870 = vmatpush1.msra.mxu0 0.0
        %871 = vmatprep.subr.mxu0 0.0
        %872 = vmatpush1.msra.mxu0 0.0
        %873 = vmatprep.subr.mxu0 0.0
        %874 = vmatpush1.msra.mxu0 0.0
        %875 = vmatprep.subr.mxu0 0.0
        %876 = vmatpush1.msra.mxu0 0.0
        %877 = vmatprep.mubr.f32.mxu0 0.0
        %878 = vmatmul.mubr.f32.gmra.mrb[0].mxu0 %v657
        %v879 = vpop.f32.mrb[0].mxu0
        %v880 = vadd.f32 %v812, %v879
        %v881 = vpop.f32.mrb[0].mxu0
        %882 = vdwg.mxu0
        %v883 = vld [vmem:[#allocation7] sm:$0xff]
        %v884 = vld [vmem:[#allocation7 + $0x8] sm:$0xff]
        %v885 = vld [vmem:[#allocation7 + $0x10] sm:$0xff]
        %v886 = vld [vmem:[#allocation7 + $0x18] sm:$0xff]
        %v887 = vld [vmem:[%s10] sm:$0x1]
        %v889 = vsel %vm655, %v649, 0
        %891 = vmatprep.subr.mxu0 0.0
        %892 = vmatpush1.msra.mxu0 %v883
        %893 = vmatprep.subr.mxu0 0.0
        %894 = vmatpush1.msra.mxu0 %v884
        %895 = vmatprep.subr.mxu0 0.0
        %896 = vmatpush1.msra.mxu0 %v885
        %897 = vmatprep.subr.mxu0 0.0
        %898 = vmatpush1.msra.mxu0 %v886
        %899 = vmatprep.subr.mxu0 0.0
        %900 = vmatpush1.msra.mxu0 0.0
        %901 = vmatprep.subr.mxu0 0.0
        %902 = vmatpush1.msra.mxu0 0.0
        %903 = vmatprep.subr.mxu0 0.0
        %904 = vmatpush1.msra.mxu0 0.0
        %905 = vmatprep.subr.mxu0 0.0
        %906 = vmatpush1.msra.mxu0 0.0
        %907 = vmatprep.subr.mxu0 0.0
        %908 = vmatpush1.msra.mxu0 0.0
        %909 = vmatprep.subr.mxu0 0.0
        %910 = vmatpush1.msra.mxu0 0.0
        %911 = vmatprep.subr.mxu0 0.0
        %912 = vmatpush1.msra.mxu0 0.0
        %913 = vmatprep.subr.mxu0 0.0
        %914 = vmatpush1.msra.mxu0 0.0
        %915 = vmatprep.subr.mxu0 0.0
        %916 = vmatpush1.msra.mxu0 0.0
        %917 = vmatprep.subr.mxu0 0.0
        %918 = vmatpush1.msra.mxu0 0.0
        %919 = vmatprep.subr.mxu0 0.0
        %920 = vmatpush1.msra.mxu0 0.0
        %921 = vmatprep.subr.mxu0 0.0
        %922 = vmatpush1.msra.mxu0 0.0
        %923 = vmatprep.subr.mxu0 0.0
        %924 = vmatpush1.msra.mxu0 0.0
        %925 = vmatprep.subr.mxu0 0.0
        %926 = vmatpush1.msra.mxu0 0.0
        %927 = vmatprep.subr.mxu0 0.0
        %928 = vmatpush1.msra.mxu0 0.0
        %929 = vmatprep.subr.mxu0 0.0
        %930 = vmatpush1.msra.mxu0 0.0
        %931 = vmatprep.subr.mxu0 0.0
        %932 = vmatpush1.msra.mxu0 0.0
        %933 = vmatprep.subr.mxu0 0.0
        %934 = vmatpush1.msra.mxu0 0.0
        %935 = vmatprep.subr.mxu0 0.0
        %936 = vmatpush1.msra.mxu0 0.0
        %937 = vmatprep.subr.mxu0 0.0
        %938 = vmatpush1.msra.mxu0 0.0
        %939 = vmatprep.subr.mxu0 0.0
        %940 = vmatpush1.msra.mxu0 0.0
        %941 = vmatprep.subr.mxu0 0.0
        %942 = vmatpush1.msra.mxu0 0.0
        %943 = vmatprep.subr.mxu0 0.0
        %944 = vmatpush1.msra.mxu0 0.0
        %945 = vmatprep.subr.mxu0 0.0
        %946 = vmatpush1.msra.mxu0 0.0
        %947 = vmatprep.subr.mxu0 0.0
        %948 = vmatpush1.msra.mxu0 0.0
        %949 = vmatprep.subr.mxu0 0.0
        %950 = vmatpush1.msra.mxu0 0.0
        %951 = vmatprep.subr.mxu0 0.0
        %952 = vmatpush1.msra.mxu0 0.0
        %953 = vmatprep.subr.mxu0 0.0
        %954 = vmatpush1.msra.mxu0 0.0
        %955 = vmatprep.mubr.f32.mxu0 0.0
        %956 = vmatmul.mubr.f32.gmra.mrb[0].mxu0 %v889
        %v957 = vpop.f32.mrb[0].mxu0
        %v958 = vadd.f32 %v887, %v957
        %v959 = vpop.f32.mrb[0].mxu0
        %960 = vdwg.mxu0
        %s961 = scalar_lea.vmem [#allocation7], 32
        %v962 = vld [vmem:[%s961] sm:$0xff]
        %v963 = vld [vmem:[%s961 + $0x8] sm:$0xff]
        %v964 = vld [vmem:[%s961 + $0x10] sm:$0xff]
        %v965 = vld [vmem:[%s961 + $0x18] sm:$0xff]
        %s966 = scalar_lea.vmem %s10, 1
        %v967 = vld [vmem:[%s966] sm:$0x1]
        %968 = vmatprep.subr.mxu0 0.0
        %969 = vmatpush1.msra.mxu0 %v962
        %970 = vmatprep.subr.mxu0 0.0
        %971 = vmatpush1.msra.mxu0 %v963
        %972 = vmatprep.subr.mxu0 0.0
        %973 = vmatpush1.msra.mxu0 %v964
        %974 = vmatprep.subr.mxu0 0.0
        %975 = vmatpush1.msra.mxu0 %v965
        %976 = vmatprep.subr.mxu0 0.0
        %977 = vmatpush1.msra.mxu0 0.0
        %978 = vmatprep.subr.mxu0 0.0
        %979 = vmatpush1.msra.mxu0 0.0
        %980 = vmatprep.subr.mxu0 0.0
        %981 = vmatpush1.msra.mxu0 0.0
        %982 = vmatprep.subr.mxu0 0.0
        %983 = vmatpush1.msra.mxu0 0.0
        %984 = vmatprep.subr.mxu0 0.0
        %985 = vmatpush1.msra.mxu0 0.0
        %986 = vmatprep.subr.mxu0 0.0
        %987 = vmatpush1.msra.mxu0 0.0
        %988 = vmatprep.subr.mxu0 0.0
        %989 = vmatpush1.msra.mxu0 0.0
        %990 = vmatprep.subr.mxu0 0.0
        %991 = vmatpush1.msra.mxu0 0.0
        %992 = vmatprep.subr.mxu0 0.0
        %993 = vmatpush1.msra.mxu0 0.0
        %994 = vmatprep.subr.mxu0 0.0
        %995 = vmatpush1.msra.mxu0 0.0
        %996 = vmatprep.subr.mxu0 0.0
        %997 = vmatpush1.msra.mxu0 0.0
        %998 = vmatprep.subr.mxu0 0.0
        %999 = vmatpush1.msra.mxu0 0.0
        %1000 = vmatprep.subr.mxu0 0.0
        %1001 = vmatpush1.msra.mxu0 0.0
        %1002 = vmatprep.subr.mxu0 0.0
        %1003 = vmatpush1.msra.mxu0 0.0
        %1004 = vmatprep.subr.mxu0 0.0
        %1005 = vmatpush1.msra.mxu0 0.0
        %1006 = vmatprep.subr.mxu0 0.0
        %1007 = vmatpush1.msra.mxu0 0.0
        %1008 = vmatprep.subr.mxu0 0.0
        %1009 = vmatpush1.msra.mxu0 0.0
        %1010 = vmatprep.subr.mxu0 0.0
        %1011 = vmatpush1.msra.mxu0 0.0
        %1012 = vmatprep.subr.mxu0 0.0
        %1013 = vmatpush1.msra.mxu0 0.0
        %1014 = vmatprep.subr.mxu0 0.0
        %1015 = vmatpush1.msra.mxu0 0.0
        %1016 = vmatprep.subr.mxu0 0.0
        %1017 = vmatpush1.msra.mxu0 0.0
        %1018 = vmatprep.subr.mxu0 0.0
        %1019 = vmatpush1.msra.mxu0 0.0
        %1020 = vmatprep.subr.mxu0 0.0
        %1021 = vmatpush1.msra.mxu0 0.0
        %1022 = vmatprep.subr.mxu0 0.0
        %1023 = vmatpush1.msra.mxu0 0.0
        %1024 = vmatprep.subr.mxu0 0.0
        %1025 = vmatpush1.msra.mxu0 0.0
        %1026 = vmatprep.subr.mxu0 0.0
        %1027 = vmatpush1.msra.mxu0 0.0
        %1028 = vmatprep.subr.mxu0 0.0
        %1029 = vmatpush1.msra.mxu0 0.0
        %1030 = vmatprep.subr.mxu0 0.0
        %1031 = vmatpush1.msra.mxu0 0.0
        %1032 = vmatprep.mubr.f32.mxu0 0.0
        %1033 = vmatmul.mubr.f32.gmra.mrb[0].mxu0 %v889
        %v1034 = vpop.f32.mrb[0].mxu0
        %v1035 = vadd.f32 %v967, %v1034
        %v1036 = vpop.f32.mrb[0].mxu0
        %1037 = vdwg.mxu0
        %s1038 = scalar_lea.vmem [#allocation7], 64
        %v1039 = vld [vmem:[%s1038] sm:$0xff]
        %v1040 = vld [vmem:[%s1038 + $0x8] sm:$0xff]
        %v1041 = vld [vmem:[%s1038 + $0x10] sm:$0xff]
        %v1042 = vld [vmem:[%s1038 + $0x18] sm:$0xff]
        %s1043 = scalar_lea.vmem %s10, 2
        %v1044 = vld [vmem:[%s1043] sm:$0x1]
        %1045 = vmatprep.subr.mxu0 0.0
        %1046 = vmatpush1.msra.mxu0 %v1039
        %1047 = vmatprep.subr.mxu0 0.0
        %1048 = vmatpush1.msra.mxu0 %v1040
        %1049 = vmatprep.subr.mxu0 0.0
        %1050 = vmatpush1.msra.mxu0 %v1041
        %1051 = vmatprep.subr.mxu0 0.0
        %1052 = vmatpush1.msra.mxu0 %v1042
        %1053 = vmatprep.subr.mxu0 0.0
        %1054 = vmatpush1.msra.mxu0 0.0
        %1055 = vmatprep.subr.mxu0 0.0
        %1056 = vmatpush1.msra.mxu0 0.0
        %1057 = vmatprep.subr.mxu0 0.0
        %1058 = vmatpush1.msra.mxu0 0.0
        %1059 = vmatprep.subr.mxu0 0.0
        %1060 = vmatpush1.msra.mxu0 0.0
        %1061 = vmatprep.subr.mxu0 0.0
        %1062 = vmatpush1.msra.mxu0 0.0
        %1063 = vmatprep.subr.mxu0 0.0
        %1064 = vmatpush1.msra.mxu0 0.0
        %1065 = vmatprep.subr.mxu0 0.0
        %1066 = vmatpush1.msra.mxu0 0.0
        %1067 = vmatprep.subr.mxu0 0.0
        %1068 = vmatpush1.msra.mxu0 0.0
        %1069 = vmatprep.subr.mxu0 0.0
        %1070 = vmatpush1.msra.mxu0 0.0
        %1071 = vmatprep.subr.mxu0 0.0
        %1072 = vmatpush1.msra.mxu0 0.0
        %1073 = vmatprep.subr.mxu0 0.0
        %1074 = vmatpush1.msra.mxu0 0.0
        %1075 = vmatprep.subr.mxu0 0.0
        %1076 = vmatpush1.msra.mxu0 0.0
        %1077 = vmatprep.subr.mxu0 0.0
        %1078 = vmatpush1.msra.mxu0 0.0
        %1079 = vmatprep.subr.mxu0 0.0
        %1080 = vmatpush1.msra.mxu0 0.0
        %1081 = vmatprep.subr.mxu0 0.0
        %1082 = vmatpush1.msra.mxu0 0.0
        %1083 = vmatprep.subr.mxu0 0.0
        %1084 = vmatpush1.msra.mxu0 0.0
        %1085 = vmatprep.subr.mxu0 0.0
        %1086 = vmatpush1.msra.mxu0 0.0
        %1087 = vmatprep.subr.mxu0 0.0
        %1088 = vmatpush1.msra.mxu0 0.0
        %1089 = vmatprep.subr.mxu0 0.0
        %1090 = vmatpush1.msra.mxu0 0.0
        %1091 = vmatprep.subr.mxu0 0.0
        %1092 = vmatpush1.msra.mxu0 0.0
        %1093 = vmatprep.subr.mxu0 0.0
        %1094 = vmatpush1.msra.mxu0 0.0
        %1095 = vmatprep.subr.mxu0 0.0
        %1096 = vmatpush1.msra.mxu0 0.0
        %1097 = vmatprep.subr.mxu0 0.0
        %1098 = vmatpush1.msra.mxu0 0.0
        %1099 = vmatprep.subr.mxu0 0.0
        %1100 = vmatpush1.msra.mxu0 0.0
        %1101 = vmatprep.subr.mxu0 0.0
        %1102 = vmatpush1.msra.mxu0 0.0
        %1103 = vmatprep.subr.mxu0 0.0
        %1104 = vmatpush1.msra.mxu0 0.0
        %1105 = vmatprep.subr.mxu0 0.0
        %1106 = vmatpush1.msra.mxu0 0.0
        %1107 = vmatprep.subr.mxu0 0.0
        %1108 = vmatpush1.msra.mxu0 0.0
        %1109 = vmatprep.mubr.f32.mxu0 0.0
        %1110 = vmatmul.mubr.f32.gmra.mrb[0].mxu0 %v889
        %v1111 = vpop.f32.mrb[0].mxu0
        %v1112 = vadd.f32 %v1044, %v1111
        %v1113 = vpop.f32.mrb[0].mxu0
        %1114 = vdwg.mxu0
        %v1115 = vadd.f32 %v726, %v958
        %v1116 = vxor.u32 %v1115, 2147483648
        %v1117 = vmul.f32 %v1116, 1.442695
        %v1118 = vpow.pop %v1117
        %v1119 = vadd.f32 %v1118, 1.0
        %v1120 = vrcp.pop %v1119
        %v1121 = vmul.f32 1.0, %v1120
        %v1122 = vadd.f32 %v803, %v1035
        %v1123 = vxor.u32 %v1122, 2147483648
        %v1124 = vmul.f32 %v1123, 1.442695
        %v1125 = vpow.pop %v1124
        %v1126 = vadd.f32 %v1125, 1.0
        %v1127 = vrcp.pop %v1126
        %v1128 = vmul.f32 1.0, %v1127
        %v1129 = vmul.f32 %v1121, %v1112
        %v1130 = vadd.f32 %v880, %v1129
        %v1131 = vtanh.pop %v1130
        %v1132 = vsub.f32 1.0, %v1128
        %v1133 = vmul.f32 %v1132, %v1131
        %v1134 = vmul.f32 %v1128, %v649
        %v1135 = vadd.f32 %v1133, %v1134
        %vm1136 = vcmask 253952
        %1137 = vst.msk [vmem:[#allocation3] sm:$0x1] %vm1136, %v1135
        %s1138 = scalar_lea.vmem [#allocation3], 1
        %v1139 = vld [vmem:[%s1138] sm:$0x1]
        %s1140 = scalar_lea.vmem [#allocation4], 96
        %v1141 = vld [vmem:[%s1140] sm:$0xff]
        %v1142 = vld [vmem:[%s1140 + $0x8] sm:$0xff]
        %v1143 = vld [vmem:[%s1140 + $0x10] sm:$0xff]
        %v1144 = vld [vmem:[%s1140 + $0x18] sm:$0xff]
        %s1145 = scalar_lea.vmem %s9, 3
        %v1146 = vld [vmem:[%s1145] sm:$0x1]
        %v1148 = vsel %vm655, %v1135, 0
        %1150 = vmatprep.subr.mxu0 0.0
        %1151 = vmatpush1.msra.mxu0 %v1141
        %1152 = vmatprep.subr.mxu0 0.0
        %1153 = vmatpush1.msra.mxu0 %v1142
        %1154 = vmatprep.subr.mxu0 0.0
        %1155 = vmatpush1.msra.mxu0 %v1143
        %1156 = vmatprep.subr.mxu0 0.0
        %1157 = vmatpush1.msra.mxu0 %v1144
        %1158 = vmatprep.subr.mxu0 0.0
        %1159 = vmatpush1.msra.mxu0 0.0
        %1160 = vmatprep.subr.mxu0 0.0
        %1161 = vmatpush1.msra.mxu0 0.0
        %1162 = vmatprep.subr.mxu0 0.0
        %1163 = vmatpush1.msra.mxu0 0.0
        %1164 = vmatprep.subr.mxu0 0.0
        %1165 = vmatpush1.msra.mxu0 0.0
        %1166 = vmatprep.subr.mxu0 0.0
        %1167 = vmatpush1.msra.mxu0 0.0
        %1168 = vmatprep.subr.mxu0 0.0
        %1169 = vmatpush1.msra.mxu0 0.0
        %1170 = vmatprep.subr.mxu0 0.0
        %1171 = vmatpush1.msra.mxu0 0.0
        %1172 = vmatprep.subr.mxu0 0.0
        %1173 = vmatpush1.msra.mxu0 0.0
        %1174 = vmatprep.subr.mxu0 0.0
        %1175 = vmatpush1.msra.mxu0 0.0
        %1176 = vmatprep.subr.mxu0 0.0
        %1177 = vmatpush1.msra.mxu0 0.0
        %1178 = vmatprep.subr.mxu0 0.0
        %1179 = vmatpush1.msra.mxu0 0.0
        %1180 = vmatprep.subr.mxu0 0.0
        %1181 = vmatpush1.msra.mxu0 0.0
        %1182 = vmatprep.subr.mxu0 0.0
        %1183 = vmatpush1.msra.mxu0 0.0
        %1184 = vmatprep.subr.mxu0 0.0
        %1185 = vmatpush1.msra.mxu0 0.0
        %1186 = vmatprep.subr.mxu0 0.0
        %1187 = vmatpush1.msra.mxu0 0.0
        %1188 = vmatprep.subr.mxu0 0.0
        %1189 = vmatpush1.msra.mxu0 0.0
        %1190 = vmatprep.subr.mxu0 0.0
        %1191 = vmatpush1.msra.mxu0 0.0
        %1192 = vmatprep.subr.mxu0 0.0
        %1193 = vmatpush1.msra.mxu0 0.0
        %1194 = vmatprep.subr.mxu0 0.0
        %1195 = vmatpush1.msra.mxu0 0.0
        %1196 = vmatprep.subr.mxu0 0.0
        %1197 = vmatpush1.msra.mxu0 0.0
        %1198 = vmatprep.subr.mxu0 0.0
        %1199 = vmatpush1.msra.mxu0 0.0
        %1200 = vmatprep.subr.mxu0 0.0
        %1201 = vmatpush1.msra.mxu0 0.0
        %1202 = vmatprep.subr.mxu0 0.0
        %1203 = vmatpush1.msra.mxu0 0.0
        %1204 = vmatprep.subr.mxu0 0.0
        %1205 = vmatpush1.msra.mxu0 0.0
        %1206 = vmatprep.subr.mxu0 0.0
        %1207 = vmatpush1.msra.mxu0 0.0
        %1208 = vmatprep.subr.mxu0 0.0
        %1209 = vmatpush1.msra.mxu0 0.0
        %1210 = vmatprep.subr.mxu0 0.0
        %1211 = vmatpush1.msra.mxu0 0.0
        %1212 = vmatprep.subr.mxu0 0.0
        %1213 = vmatpush1.msra.mxu0 0.0
        %1214 = vmatprep.mubr.f32.mxu0 0.0
        %1215 = vmatmul.mubr.f32.gmra.mrb[0].mxu0 %v1148
        %v1216 = vpop.f32.mrb[0].mxu0
        %v1217 = vadd.f32 %v1146, %v1216
        %v1218 = vpop.f32.mrb[0].mxu0
        %1219 = vdwg.mxu0
        %s1220 = scalar_lea.vmem [#allocation4], 128
        %v1221 = vld [vmem:[%s1220] sm:$0xff]
        %v1222 = vld [vmem:[%s1220 + $0x8] sm:$0xff]
        %v1223 = vld [vmem:[%s1220 + $0x10] sm:$0xff]
        %v1224 = vld [vmem:[%s1220 + $0x18] sm:$0xff]
        %s1225 = scalar_lea.vmem %s9, 4
        %v1226 = vld [vmem:[%s1225] sm:$0x1]
        %1227 = vmatprep.subr.mxu0 0.0
        %1228 = vmatpush1.msra.mxu0 %v1221
        %1229 = vmatprep.subr.mxu0 0.0
        %1230 = vmatpush1.msra.mxu0 %v1222
        %1231 = vmatprep.subr.mxu0 0.0
        %1232 = vmatpush1.msra.mxu0 %v1223
        %1233 = vmatprep.subr.mxu0 0.0
        %1234 = vmatpush1.msra.mxu0 %v1224
        %1235 = vmatprep.subr.mxu0 0.0
        %1236 = vmatpush1.msra.mxu0 0.0
        %1237 = vmatprep.subr.mxu0 0.0
        %1238 = vmatpush1.msra.mxu0 0.0
        %1239 = vmatprep.subr.mxu0 0.0
        %1240 = vmatpush1.msra.mxu0 0.0
        %1241 = vmatprep.subr.mxu0 0.0
        %1242 = vmatpush1.msra.mxu0 0.0
        %1243 = vmatprep.subr.mxu0 0.0
        %1244 = vmatpush1.msra.mxu0 0.0
        %1245 = vmatprep.subr.mxu0 0.0
        %1246 = vmatpush1.msra.mxu0 0.0
        %1247 = vmatprep.subr.mxu0 0.0
        %1248 = vmatpush1.msra.mxu0 0.0
        %1249 = vmatprep.subr.mxu0 0.0
        %1250 = vmatpush1.msra.mxu0 0.0
        %1251 = vmatprep.subr.mxu0 0.0
        %1252 = vmatpush1.msra.mxu0 0.0
        %1253 = vmatprep.subr.mxu0 0.0
        %1254 = vmatpush1.msra.mxu0 0.0
        %1255 = vmatprep.subr.mxu0 0.0
        %1256 = vmatpush1.msra.mxu0 0.0
        %1257 = vmatprep.subr.mxu0 0.0
        %1258 = vmatpush1.msra.mxu0 0.0
        %1259 = vmatprep.subr.mxu0 0.0
        %1260 = vmatpush1.msra.mxu0 0.0
        %1261 = vmatprep.subr.mxu0 0.0
        %1262 = vmatpush1.msra.mxu0 0.0
        %1263 = vmatprep.subr.mxu0 0.0
        %1264 = vmatpush1.msra.mxu0 0.0
        %1265 = vmatprep.subr.mxu0 0.0
        %1266 = vmatpush1.msra.mxu0 0.0
        %1267 = vmatprep.subr.mxu0 0.0
        %1268 = vmatpush1.msra.mxu0 0.0
        %1269 = vmatprep.subr.mxu0 0.0
        %1270 = vmatpush1.msra.mxu0 0.0
        %1271 = vmatprep.subr.mxu0 0.0
        %1272 = vmatpush1.msra.mxu0 0.0
        %1273 = vmatprep.subr.mxu0 0.0
        %1274 = vmatpush1.msra.mxu0 0.0
        %1275 = vmatprep.subr.mxu0 0.0
        %1276 = vmatpush1.msra.mxu0 0.0
        %1277 = vmatprep.subr.mxu0 0.0
        %1278 = vmatpush1.msra.mxu0 0.0
        %1279 = vmatprep.subr.mxu0 0.0
        %1280 = vmatpush1.msra.mxu0 0.0
        %1281 = vmatprep.subr.mxu0 0.0
        %1282 = vmatpush1.msra.mxu0 0.0
        %1283 = vmatprep.subr.mxu0 0.0
        %1284 = vmatpush1.msra.mxu0 0.0
        %1285 = vmatprep.subr.mxu0 0.0
        %1286 = vmatpush1.msra.mxu0 0.0
        %1287 = vmatprep.subr.mxu0 0.0
        %1288 = vmatpush1.msra.mxu0 0.0
        %1289 = vmatprep.subr.mxu0 0.0
        %1290 = vmatpush1.msra.mxu0 0.0
        %1291 = vmatprep.mubr.f32.mxu0 0.0
        %1292 = vmatmul.mubr.f32.gmra.mrb[0].mxu0 %v1148
        %v1293 = vpop.f32.mrb[0].mxu0
        %v1294 = vadd.f32 %v1226, %v1293
        %v1295 = vpop.f32.mrb[0].mxu0
        %1296 = vdwg.mxu0
        %s1297 = scalar_lea.vmem [#allocation4], 160
        %v1298 = vld [vmem:[%s1297] sm:$0xff]
        %v1299 = vld [vmem:[%s1297 + $0x8] sm:$0xff]
        %v1300 = vld [vmem:[%s1297 + $0x10] sm:$0xff]
        %v1301 = vld [vmem:[%s1297 + $0x18] sm:$0xff]
        %s1302 = scalar_lea.vmem %s9, 5
        %v1303 = vld [vmem:[%s1302] sm:$0x1]
        %1304 = vmatprep.subr.mxu0 0.0
        %1305 = vmatpush1.msra.mxu0 %v1298
        %1306 = vmatprep.subr.mxu0 0.0
        %1307 = vmatpush1.msra.mxu0 %v1299
        %1308 = vmatprep.subr.mxu0 0.0
        %1309 = vmatpush1.msra.mxu0 %v1300
        %1310 = vmatprep.subr.mxu0 0.0
        %1311 = vmatpush1.msra.mxu0 %v1301
        %1312 = vmatprep.subr.mxu0 0.0
        %1313 = vmatpush1.msra.mxu0 0.0
        %1314 = vmatprep.subr.mxu0 0.0
        %1315 = vmatpush1.msra.mxu0 0.0
        %1316 = vmatprep.subr.mxu0 0.0
        %1317 = vmatpush1.msra.mxu0 0.0
        %1318 = vmatprep.subr.mxu0 0.0
        %1319 = vmatpush1.msra.mxu0 0.0
        %1320 = vmatprep.subr.mxu0 0.0
        %1321 = vmatpush1.msra.mxu0 0.0
        %1322 = vmatprep.subr.mxu0 0.0
        %1323 = vmatpush1.msra.mxu0 0.0
        %1324 = vmatprep.subr.mxu0 0.0
        %1325 = vmatpush1.msra.mxu0 0.0
        %1326 = vmatprep.subr.mxu0 0.0
        %1327 = vmatpush1.msra.mxu0 0.0
        %1328 = vmatprep.subr.mxu0 0.0
        %1329 = vmatpush1.msra.mxu0 0.0
        %1330 = vmatprep.subr.mxu0 0.0
        %1331 = vmatpush1.msra.mxu0 0.0
        %1332 = vmatprep.subr.mxu0 0.0
        %1333 = vmatpush1.msra.mxu0 0.0
        %1334 = vmatprep.subr.mxu0 0.0
        %1335 = vmatpush1.msra.mxu0 0.0
        %1336 = vmatprep.subr.mxu0 0.0
        %1337 = vmatpush1.msra.mxu0 0.0
        %1338 = vmatprep.subr.mxu0 0.0
        %1339 = vmatpush1.msra.mxu0 0.0
        %1340 = vmatprep.subr.mxu0 0.0
        %1341 = vmatpush1.msra.mxu0 0.0
        %1342 = vmatprep.subr.mxu0 0.0
        %1343 = vmatpush1.msra.mxu0 0.0
        %1344 = vmatprep.subr.mxu0 0.0
        %1345 = vmatpush1.msra.mxu0 0.0
        %1346 = vmatprep.subr.mxu0 0.0
        %1347 = vmatpush1.msra.mxu0 0.0
        %1348 = vmatprep.subr.mxu0 0.0
        %1349 = vmatpush1.msra.mxu0 0.0
        %1350 = vmatprep.subr.mxu0 0.0
        %1351 = vmatpush1.msra.mxu0 0.0
        %1352 = vmatprep.subr.mxu0 0.0
        %1353 = vmatpush1.msra.mxu0 0.0
        %1354 = vmatprep.subr.mxu0 0.0
        %1355 = vmatpush1.msra.mxu0 0.0
        %1356 = vmatprep.subr.mxu0 0.0
        %1357 = vmatpush1.msra.mxu0 0.0
        %1358 = vmatprep.subr.mxu0 0.0
        %1359 = vmatpush1.msra.mxu0 0.0
        %1360 = vmatprep.subr.mxu0 0.0
        %1361 = vmatpush1.msra.mxu0 0.0
        %1362 = vmatprep.subr.mxu0 0.0
        %1363 = vmatpush1.msra.mxu0 0.0
        %1364 = vmatprep.subr.mxu0 0.0
        %1365 = vmatpush1.msra.mxu0 0.0
        %1366 = vmatprep.subr.mxu0 0.0
        %1367 = vmatpush1.msra.mxu0 0.0
        %1368 = vmatprep.mubr.f32.mxu0 0.0
        %1369 = vmatmul.mubr.f32.gmra.mrb[0].mxu0 %v1148
        %v1370 = vpop.f32.mrb[0].mxu0
        %v1371 = vadd.f32 %v1303, %v1370
        %v1372 = vpop.f32.mrb[0].mxu0
        %1373 = vdwg.mxu0
        %s1374 = scalar_lea.vmem [#allocation7], 96
        %v1375 = vld [vmem:[%s1374] sm:$0xff]
        %v1376 = vld [vmem:[%s1374 + $0x8] sm:$0xff]
        %v1377 = vld [vmem:[%s1374 + $0x10] sm:$0xff]
        %v1378 = vld [vmem:[%s1374 + $0x18] sm:$0xff]
        %s1379 = scalar_lea.vmem %s10, 3
        %v1380 = vld [vmem:[%s1379] sm:$0x1]
        %v1382 = vsel %vm655, %v1139, 0
        %1384 = vmatprep.subr.mxu0 0.0
        %1385 = vmatpush1.msra.mxu0 %v1375
        %1386 = vmatprep.subr.mxu0 0.0
        %1387 = vmatpush1.msra.mxu0 %v1376
        %1388 = vmatprep.subr.mxu0 0.0
        %1389 = vmatpush1.msra.mxu0 %v1377
        %1390 = vmatprep.subr.mxu0 0.0
        %1391 = vmatpush1.msra.mxu0 %v1378
        %1392 = vmatprep.subr.mxu0 0.0
        %1393 = vmatpush1.msra.mxu0 0.0
        %1394 = vmatprep.subr.mxu0 0.0
        %1395 = vmatpush1.msra.mxu0 0.0
        %1396 = vmatprep.subr.mxu0 0.0
        %1397 = vmatpush1.msra.mxu0 0.0
        %1398 = vmatprep.subr.mxu0 0.0
        %1399 = vmatpush1.msra.mxu0 0.0
        %1400 = vmatprep.subr.mxu0 0.0
        %1401 = vmatpush1.msra.mxu0 0.0
        %1402 = vmatprep.subr.mxu0 0.0
        %1403 = vmatpush1.msra.mxu0 0.0
        %1404 = vmatprep.subr.mxu0 0.0
        %1405 = vmatpush1.msra.mxu0 0.0
        %1406 = vmatprep.subr.mxu0 0.0
        %1407 = vmatpush1.msra.mxu0 0.0
        %1408 = vmatprep.subr.mxu0 0.0
        %1409 = vmatpush1.msra.mxu0 0.0
        %1410 = vmatprep.subr.mxu0 0.0
        %1411 = vmatpush1.msra.mxu0 0.0
        %1412 = vmatprep.subr.mxu0 0.0
        %1413 = vmatpush1.msra.mxu0 0.0
        %1414 = vmatprep.subr.mxu0 0.0
        %1415 = vmatpush1.msra.mxu0 0.0
        %1416 = vmatprep.subr.mxu0 0.0
        %1417 = vmatpush1.msra.mxu0 0.0
        %1418 = vmatprep.subr.mxu0 0.0
        %1419 = vmatpush1.msra.mxu0 0.0
        %1420 = vmatprep.subr.mxu0 0.0
        %1421 = vmatpush1.msra.mxu0 0.0
        %1422 = vmatprep.subr.mxu0 0.0
        %1423 = vmatpush1.msra.mxu0 0.0
        %1424 = vmatprep.subr.mxu0 0.0
        %1425 = vmatpush1.msra.mxu0 0.0
        %1426 = vmatprep.subr.mxu0 0.0
        %1427 = vmatpush1.msra.mxu0 0.0
        %1428 = vmatprep.subr.mxu0 0.0
        %1429 = vmatpush1.msra.mxu0 0.0
        %1430 = vmatprep.subr.mxu0 0.0
        %1431 = vmatpush1.msra.mxu0 0.0
        %1432 = vmatprep.subr.mxu0 0.0
        %1433 = vmatpush1.msra.mxu0 0.0
        %1434 = vmatprep.subr.mxu0 0.0
        %1435 = vmatpush1.msra.mxu0 0.0
        %1436 = vmatprep.subr.mxu0 0.0
        %1437 = vmatpush1.msra.mxu0 0.0
        %1438 = vmatprep.subr.mxu0 0.0
        %1439 = vmatpush1.msra.mxu0 0.0
        %1440 = vmatprep.subr.mxu0 0.0
        %1441 = vmatpush1.msra.mxu0 0.0
        %1442 = vmatprep.subr.mxu0 0.0
        %1443 = vmatpush1.msra.mxu0 0.0
        %1444 = vmatprep.subr.mxu0 0.0
        %1445 = vmatpush1.msra.mxu0 0.0
        %1446 = vmatprep.subr.mxu0 0.0
        %1447 = vmatpush1.msra.mxu0 0.0
        %1448 = vmatprep.mubr.f32.mxu0 0.0
        %1449 = vmatmul.mubr.f32.gmra.mrb[0].mxu0 %v1382
        %v1450 = vpop.f32.mrb[0].mxu0
        %v1451 = vadd.f32 %v1380, %v1450
        %v1452 = vpop.f32.mrb[0].mxu0
        %1453 = vdwg.mxu0
        %s1454 = scalar_lea.vmem [#allocation7], 128
        %v1455 = vld [vmem:[%s1454] sm:$0xff]
        %v1456 = vld [vmem:[%s1454 + $0x8] sm:$0xff]
        %v1457 = vld [vmem:[%s1454 + $0x10] sm:$0xff]
        %v1458 = vld [vmem:[%s1454 + $0x18] sm:$0xff]
        %s1459 = scalar_lea.vmem %s10, 4
        %v1460 = vld [vmem:[%s1459] sm:$0x1]
        %1461 = vmatprep.subr.mxu0 0.0
        %1462 = vmatpush1.msra.mxu0 %v1455
        %1463 = vmatprep.subr.mxu0 0.0
        %1464 = vmatpush1.msra.mxu0 %v1456
        %1465 = vmatprep.subr.mxu0 0.0
        %1466 = vmatpush1.msra.mxu0 %v1457
        %1467 = vmatprep.subr.mxu0 0.0
        %1468 = vmatpush1.msra.mxu0 %v1458
        %1469 = vmatprep.subr.mxu0 0.0
        %1470 = vmatpush1.msra.mxu0 0.0
        %1471 = vmatprep.subr.mxu0 0.0
        %1472 = vmatpush1.msra.mxu0 0.0
        %1473 = vmatprep.subr.mxu0 0.0
        %1474 = vmatpush1.msra.mxu0 0.0
        %1475 = vmatprep.subr.mxu0 0.0
        %1476 = vmatpush1.msra.mxu0 0.0
        %1477 = vmatprep.subr.mxu0 0.0
        %1478 = vmatpush1.msra.mxu0 0.0
        %1479 = vmatprep.subr.mxu0 0.0
        %1480 = vmatpush1.msra.mxu0 0.0
        %1481 = vmatprep.subr.mxu0 0.0
        %1482 = vmatpush1.msra.mxu0 0.0
        %1483 = vmatprep.subr.mxu0 0.0
        %1484 = vmatpush1.msra.mxu0 0.0
        %1485 = vmatprep.subr.mxu0 0.0
        %1486 = vmatpush1.msra.mxu0 0.0
        %1487 = vmatprep.subr.mxu0 0.0
        %1488 = vmatpush1.msra.mxu0 0.0
        %1489 = vmatprep.subr.mxu0 0.0
        %1490 = vmatpush1.msra.mxu0 0.0
        %1491 = vmatprep.subr.mxu0 0.0
        %1492 = vmatpush1.msra.mxu0 0.0
        %1493 = vmatprep.subr.mxu0 0.0
        %1494 = vmatpush1.msra.mxu0 0.0
        %1495 = vmatprep.subr.mxu0 0.0
        %1496 = vmatpush1.msra.mxu0 0.0
        %1497 = vmatprep.subr.mxu0 0.0
        %1498 = vmatpush1.msra.mxu0 0.0
        %1499 = vmatprep.subr.mxu0 0.0
        %1500 = vmatpush1.msra.mxu0 0.0
        %1501 = vmatprep.subr.mxu0 0.0
        %1502 = vmatpush1.msra.mxu0 0.0
        %1503 = vmatprep.subr.mxu0 0.0
        %1504 = vmatpush1.msra.mxu0 0.0
        %1505 = vmatprep.subr.mxu0 0.0
        %1506 = vmatpush1.msra.mxu0 0.0
        %1507 = vmatprep.subr.mxu0 0.0
        %1508 = vmatpush1.msra.mxu0 0.0
        %1509 = vmatprep.subr.mxu0 0.0
        %1510 = vmatpush1.msra.mxu0 0.0
        %1511 = vmatprep.subr.mxu0 0.0
        %1512 = vmatpush1.msra.mxu0 0.0
        %1513 = vmatprep.subr.mxu0 0.0
        %1514 = vmatpush1.msra.mxu0 0.0
        %1515 = vmatprep.subr.mxu0 0.0
        %1516 = vmatpush1.msra.mxu0 0.0
        %1517 = vmatprep.subr.mxu0 0.0
        %1518 = vmatpush1.msra.mxu0 0.0
        %1519 = vmatprep.subr.mxu0 0.0
        %1520 = vmatpush1.msra.mxu0 0.0
        %1521 = vmatprep.subr.mxu0 0.0
        %1522 = vmatpush1.msra.mxu0 0.0
        %1523 = vmatprep.subr.mxu0 0.0
        %1524 = vmatpush1.msra.mxu0 0.0
        %1525 = vmatprep.mubr.f32.mxu0 0.0
        %1526 = vmatmul.mubr.f32.gmra.mrb[0].mxu0 %v1382
        %v1527 = vpop.f32.mrb[0].mxu0
        %v1528 = vadd.f32 %v1460, %v1527
        %v1529 = vpop.f32.mrb[0].mxu0
        %1530 = vdwg.mxu0
        %s1531 = scalar_lea.vmem [#allocation7], 160
        %v1532 = vld [vmem:[%s1531] sm:$0xff]
        %v1533 = vld [vmem:[%s1531 + $0x8] sm:$0xff]
        %v1534 = vld [vmem:[%s1531 + $0x10] sm:$0xff]
        %v1535 = vld [vmem:[%s1531 + $0x18] sm:$0xff]
        %s1536 = scalar_lea.vmem %s10, 5
        %v1537 = vld [vmem:[%s1536] sm:$0x1]
        %1538 = vmatprep.subr.mxu0 0.0
        %1539 = vmatpush1.msra.mxu0 %v1532
        %1540 = vmatprep.subr.mxu0 0.0
        %1541 = vmatpush1.msra.mxu0 %v1533
        %1542 = vmatprep.subr.mxu0 0.0
        %1543 = vmatpush1.msra.mxu0 %v1534
        %1544 = vmatprep.subr.mxu0 0.0
        %1545 = vmatpush1.msra.mxu0 %v1535
        %1546 = vmatprep.subr.mxu0 0.0
        %1547 = vmatpush1.msra.mxu0 0.0
        %1548 = vmatprep.subr.mxu0 0.0
        %1549 = vmatpush1.msra.mxu0 0.0
        %1550 = vmatprep.subr.mxu0 0.0
        %1551 = vmatpush1.msra.mxu0 0.0
        %1552 = vmatprep.subr.mxu0 0.0
        %1553 = vmatpush1.msra.mxu0 0.0
        %1554 = vmatprep.subr.mxu0 0.0
        %1555 = vmatpush1.msra.mxu0 0.0
        %1556 = vmatprep.subr.mxu0 0.0
        %1557 = vmatpush1.msra.mxu0 0.0
        %1558 = vmatprep.subr.mxu0 0.0
        %1559 = vmatpush1.msra.mxu0 0.0
        %1560 = vmatprep.subr.mxu0 0.0
        %1561 = vmatpush1.msra.mxu0 0.0
        %1562 = vmatprep.subr.mxu0 0.0
        %1563 = vmatpush1.msra.mxu0 0.0
        %1564 = vmatprep.subr.mxu0 0.0
        %1565 = vmatpush1.msra.mxu0 0.0
        %1566 = vmatprep.subr.mxu0 0.0
        %1567 = vmatpush1.msra.mxu0 0.0
        %1568 = vmatprep.subr.mxu0 0.0
        %1569 = vmatpush1.msra.mxu0 0.0
        %1570 = vmatprep.subr.mxu0 0.0
        %1571 = vmatpush1.msra.mxu0 0.0
        %1572 = vmatprep.subr.mxu0 0.0
        %1573 = vmatpush1.msra.mxu0 0.0
        %1574 = vmatprep.subr.mxu0 0.0
        %1575 = vmatpush1.msra.mxu0 0.0
        %1576 = vmatprep.subr.mxu0 0.0
        %1577 = vmatpush1.msra.mxu0 0.0
        %1578 = vmatprep.subr.mxu0 0.0
        %1579 = vmatpush1.msra.mxu0 0.0
        %1580 = vmatprep.subr.mxu0 0.0
        %1581 = vmatpush1.msra.mxu0 0.0
        %1582 = vmatprep.subr.mxu0 0.0
        %1583 = vmatpush1.msra.mxu0 0.0
        %1584 = vmatprep.subr.mxu0 0.0
        %1585 = vmatpush1.msra.mxu0 0.0
        %1586 = vmatprep.subr.mxu0 0.0
        %1587 = vmatpush1.msra.mxu0 0.0
        %1588 = vmatprep.subr.mxu0 0.0
        %1589 = vmatpush1.msra.mxu0 0.0
        %1590 = vmatprep.subr.mxu0 0.0
        %1591 = vmatpush1.msra.mxu0 0.0
        %1592 = vmatprep.subr.mxu0 0.0
        %1593 = vmatpush1.msra.mxu0 0.0
        %1594 = vmatprep.subr.mxu0 0.0
        %1595 = vmatpush1.msra.mxu0 0.0
        %1596 = vmatprep.subr.mxu0 0.0
        %1597 = vmatpush1.msra.mxu0 0.0
        %1598 = vmatprep.subr.mxu0 0.0
        %1599 = vmatpush1.msra.mxu0 0.0
        %1600 = vmatprep.subr.mxu0 0.0
        %1601 = vmatpush1.msra.mxu0 0.0
        %1602 = vmatprep.mubr.f32.mxu0 0.0
        %1603 = vmatmul.mubr.f32.gmra.mrb[0].mxu0 %v1382
        %v1604 = vpop.f32.mrb[0].mxu0
        %v1605 = vadd.f32 %v1537, %v1604
        %v1606 = vpop.f32.mrb[0].mxu0
        %1607 = vdwg.mxu0
        %v1608 = vadd.f32 %v1217, %v1451
        %v1609 = vxor.u32 %v1608, 2147483648
        %v1610 = vmul.f32 %v1609, 1.442695
        %v1611 = vpow.pop %v1610
        %v1612 = vadd.f32 %v1611, 1.0
        %v1613 = vrcp.pop %v1612
        %v1614 = vmul.f32 1.0, %v1613
        %v1615 = vadd.f32 %v1294, %v1528
        %v1616 = vxor.u32 %v1615, 2147483648
        %v1617 = vmul.f32 %v1616, 1.442695
        %v1618 = vpow.pop %v1617
        %v1619 = vadd.f32 %v1618, 1.0
        %v1620 = vrcp.pop %v1619
        %v1621 = vmul.f32 1.0, %v1620
        %v1622 = vmul.f32 %v1614, %v1605
        %v1623 = vadd.f32 %v1371, %v1622
        %v1624 = vtanh.pop %v1623
        %v1625 = vsub.f32 1.0, %v1621
        %v1626 = vmul.f32 %v1625, %v1624
        %v1627 = vmul.f32 %v1621, %v1139
        %v1628 = vadd.f32 %v1626, %v1627
        %1629 = vst.msk [vmem:[%s1138] sm:$0x1] %vm1136, %v1628
        %v1630 = vld [vmem:[%s11] sm:$0xff]
        %v1631 = vld [vmem:[%s11 + $0x8] sm:$0xff]
        %v1632 = vld [vmem:[%s11 + $0x10] sm:$0xff]
        %v1633 = vld [vmem:[%s11 + $0x18] sm:$0xff]
        %v1634 = vld [vmem:[%s12] sm:$0x1]
        %v1636 = vsel %vm655, %v1628, 0
        %1638 = vmatprep.subr.mxu0 0.0
        %1639 = vmatpush1.msra.mxu0 %v1630
        %1640 = vmatprep.subr.mxu0 0.0
        %1641 = vmatpush1.msra.mxu0 %v1631
        %1642 = vmatprep.subr.mxu0 0.0
        %1643 = vmatpush1.msra.mxu0 %v1632
        %1644 = vmatprep.subr.mxu0 0.0
        %1645 = vmatpush1.msra.mxu0 %v1633
        %1646 = vmatprep.subr.mxu0 0.0
        %1647 = vmatpush1.msra.mxu0 0.0
        %1648 = vmatprep.subr.mxu0 0.0
        %1649 = vmatpush1.msra.mxu0 0.0
        %1650 = vmatprep.subr.mxu0 0.0
        %1651 = vmatpush1.msra.mxu0 0.0
        %1652 = vmatprep.subr.mxu0 0.0
        %1653 = vmatpush1.msra.mxu0 0.0
        %1654 = vmatprep.subr.mxu0 0.0
        %1655 = vmatpush1.msra.mxu0 0.0
        %1656 = vmatprep.subr.mxu0 0.0
        %1657 = vmatpush1.msra.mxu0 0.0
        %1658 = vmatprep.subr.mxu0 0.0
        %1659 = vmatpush1.msra.mxu0 0.0
        %1660 = vmatprep.subr.mxu0 0.0
        %1661 = vmatpush1.msra.mxu0 0.0
        %1662 = vmatprep.subr.mxu0 0.0
        %1663 = vmatpush1.msra.mxu0 0.0
        %1664 = vmatprep.subr.mxu0 0.0
        %1665 = vmatpush1.msra.mxu0 0.0
        %1666 = vmatprep.subr.mxu0 0.0
        %1667 = vmatpush1.msra.mxu0 0.0
        %1668 = vmatprep.subr.mxu0 0.0
        %1669 = vmatpush1.msra.mxu0 0.0
        %1670 = vmatprep.subr.mxu0 0.0
        %1671 = vmatpush1.msra.mxu0 0.0
        %1672 = vmatprep.subr.mxu0 0.0
        %1673 = vmatpush1.msra.mxu0 0.0
        %1674 = vmatprep.subr.mxu0 0.0
        %1675 = vmatpush1.msra.mxu0 0.0
        %1676 = vmatprep.subr.mxu0 0.0
        %1677 = vmatpush1.msra.mxu0 0.0
        %1678 = vmatprep.subr.mxu0 0.0
        %1679 = vmatpush1.msra.mxu0 0.0
        %1680 = vmatprep.subr.mxu0 0.0
        %1681 = vmatpush1.msra.mxu0 0.0
        %1682 = vmatprep.subr.mxu0 0.0
        %1683 = vmatpush1.msra.mxu0 0.0
        %1684 = vmatprep.subr.mxu0 0.0
        %1685 = vmatpush1.msra.mxu0 0.0
        %1686 = vmatprep.subr.mxu0 0.0
        %1687 = vmatpush1.msra.mxu0 0.0
        %1688 = vmatprep.subr.mxu0 0.0
        %1689 = vmatpush1.msra.mxu0 0.0
        %1690 = vmatprep.subr.mxu0 0.0
        %1691 = vmatpush1.msra.mxu0 0.0
        %1692 = vmatprep.subr.mxu0 0.0
        %1693 = vmatpush1.msra.mxu0 0.0
        %1694 = vmatprep.subr.mxu0 0.0
        %1695 = vmatpush1.msra.mxu0 0.0
        %1696 = vmatprep.subr.mxu0 0.0
        %1697 = vmatpush1.msra.mxu0 0.0
        %1698 = vmatprep.subr.mxu0 0.0
        %1699 = vmatpush1.msra.mxu0 0.0
        %1700 = vmatprep.subr.mxu0 0.0
        %1701 = vmatpush1.msra.mxu0 0.0
        %1702 = vmatprep.mubr.f32.mxu0 0.0
        %1703 = vmatmul.mubr.f32.gmra.mrb[0].mxu0 %v1636
        %v1704 = vpop.f32.mrb[0].mxu0
        %v1705 = vadd.f32 %v1634, %v1704
        %v1706 = vpop.f32.mrb[0].mxu0
        %1707 = vdwg.mxu0
        %v1708 = vmax.f32 %v1705, 0.0
        %v1709 = vld [vmem:[%s3] sm:$0xf]
        %v1711 = vsel %vm496, %v1709, 0
        %1713 = vmatprep.subr.mxu0 0.0
        %1714 = vmatpush1.msra.mxu0 %v1711
        %1715 = vmatprep.subr.mxu0 0.0
        %1716 = vmatpush1.msra.mxu0 0.0
        %1717 = vmatprep.subr.mxu0 0.0
        %1718 = vmatpush1.msra.mxu0 0.0
        %1719 = vmatprep.subr.mxu0 0.0
        %1720 = vmatpush1.msra.mxu0 0.0
        %1721 = vmatprep.subr.mxu0 0.0
        %1722 = vmatpush1.msra.mxu0 0.0
        %1723 = vmatprep.subr.mxu0 0.0
        %1724 = vmatpush1.msra.mxu0 0.0
        %1725 = vmatprep.subr.mxu0 0.0
        %1726 = vmatpush1.msra.mxu0 0.0
        %1727 = vmatprep.subr.mxu0 0.0
        %1728 = vmatpush1.msra.mxu0 0.0
        %1729 = vmatprep.subr.mxu0 0.0
        %1730 = vmatpush1.msra.mxu0 0.0
        %1731 = vmatprep.subr.mxu0 0.0
        %1732 = vmatpush1.msra.mxu0 0.0
        %1733 = vmatprep.subr.mxu0 0.0
        %1734 = vmatpush1.msra.mxu0 0.0
        %1735 = vmatprep.subr.mxu0 0.0
        %1736 = vmatpush1.msra.mxu0 0.0
        %1737 = vmatprep.subr.mxu0 0.0
        %1738 = vmatpush1.msra.mxu0 0.0
        %1739 = vmatprep.subr.mxu0 0.0
        %1740 = vmatpush1.msra.mxu0 0.0
        %1741 = vmatprep.subr.mxu0 0.0
        %1742 = vmatpush1.msra.mxu0 0.0
        %1743 = vmatprep.subr.mxu0 0.0
        %1744 = vmatpush1.msra.mxu0 0.0
        %1745 = vmatprep.subr.mxu0 0.0
        %1746 = vmatpush1.msra.mxu0 0.0
        %1747 = vmatprep.subr.mxu0 0.0
        %1748 = vmatpush1.msra.mxu0 0.0
        %1749 = vmatprep.subr.mxu0 0.0
        %1750 = vmatpush1.msra.mxu0 0.0
        %1751 = vmatprep.subr.mxu0 0.0
        %1752 = vmatpush1.msra.mxu0 0.0
        %1753 = vmatprep.subr.mxu0 0.0
        %1754 = vmatpush1.msra.mxu0 0.0
        %1755 = vmatprep.subr.mxu0 0.0
        %1756 = vmatpush1.msra.mxu0 0.0
        %1757 = vmatprep.subr.mxu0 0.0
        %1758 = vmatpush1.msra.mxu0 0.0
        %1759 = vmatprep.subr.mxu0 0.0
        %1760 = vmatpush1.msra.mxu0 0.0
        %1761 = vmatprep.subr.mxu0 0.0
        %1762 = vmatpush1.msra.mxu0 0.0
        %1763 = vmatprep.subr.mxu0 0.0
        %1764 = vmatpush1.msra.mxu0 0.0
        %1765 = vmatprep.subr.mxu0 0.0
        %1766 = vmatpush1.msra.mxu0 0.0
        %1767 = vmatprep.subr.mxu0 0.0
        %1768 = vmatpush1.msra.mxu0 0.0
        %1769 = vmatprep.subr.mxu0 0.0
        %1770 = vmatpush1.msra.mxu0 0.0
        %1771 = vmatprep.subr.mxu0 0.0
        %1772 = vmatpush1.msra.mxu0 0.0
        %1773 = vmatprep.subr.mxu0 0.0
        %1774 = vmatpush1.msra.mxu0 0.0
        %1775 = vmatprep.subr.mxu0 0.0
        %1776 = vmatpush1.msra.mxu0 0.0
        %1777 = vmatprep.mubr.f32.mxu0 0.0
        %1778 = vmatmul.mubr.f32.gmra.mrb[0].mxu0 %v571
        %v1779 = vpop.f32.mrb[0].mxu0
        %v1780 = vadd.f32 %v1708, %v1779
        %v1781 = vpop.f32.mrb[0].mxu0
        %1782 = vdwg.mxu0
        %s1783 = scalar_lea.vmem %s13, %s29
        %vm1784 = vcmask 24576
        %1785 = vst.msk [vmem:[%s1783] sm:$0x1] %vm1784, %v1780
        %1786 = vst.msk [vmem:[#allocation2] sm:$0x1] %vm1784, %v1780
        %p1787 = scmp.eq.s32.totalorder %s29, 7
        // Predicated region
        $region85: #{tpu_custom_call.1} parent=71 // pred_check
          %p1788 = pneg %p1787
        $region86: #{tpu_custom_call.1} parent=71 // pred_check_branch
          %1790 = sbr.rel (%p1788) target = $region88
        $region87: #{tpu_custom_call.1} parent=71 // pred_region
          %v1791 = vld [vmem:[#allocation3] sm:$0x1]
          %v1792 = vld [vmem:[#allocation3 + $0x1] sm:$0x1]
          %1793 = vst.msk [vmem:[#allocation9] sm:$0x1] %vm1136, %v1791
          %1794 = vst.msk [vmem:[#allocation9 + $0x1] sm:$0x1] %vm1136, %v1792
        $region88: #{tpu_custom_call.1} parent=71 // pred_fallthru
          _
        // Predicated region
        $region89: #{tpu_custom_call.1} parent=71 // pred_check
          %p1795 = pneg %p320
        $region90: #{tpu_custom_call.1} parent=71 // pred_check_branch
          %1797 = sbr.rel (%p1795) target = $region92
        $region91: #{tpu_custom_call.1} parent=71 // pred_region
          _
        $region92: #{tpu_custom_call.1} parent=71 // pred_fallthru
          _
        // Predicated region
        $region93: #{tpu_custom_call.1} parent=71 // pred_check
          %p1798 = pneg %p341
        $region94: #{tpu_custom_call.1} parent=71 // pred_check_branch
          %1800 = sbr.rel (%p1798) target = $region96
        $region95: #{tpu_custom_call.1} parent=71 // pred_region
          %s1802 = ssub.s32 32, 32
          %1803 = vsyncadd [#allocation6], %s1802
          %s1804 = sshll.u32 [#allocation9], 4
          %s1805 = int_to_ptr.vmem [resolvable:$true] %s1804
          %1810 = dma.vmem_to_hbm [thread:$0]  %s1805, 32, %s14, [#allocation6], 16, 16, 1
        $region96: #{tpu_custom_call.1} parent=71 // pred_fallthru
          _
        // Predicated region
        $region97: #{tpu_custom_call.1} parent=71 // pred_check
          %p1811 = pneg %p320
        $region98: #{tpu_custom_call.1} parent=71 // pred_check_branch
          %1813 = sbr.rel (%p1811) target = $region100
        $region99: #{tpu_custom_call.1} parent=71 // pred_region
          _
        $region100: #{tpu_custom_call.1} parent=71 // pred_fallthru
          _
        // Predicated region
        $region101: #{tpu_custom_call.1} parent=71 // pred_check
          %p1814 = pneg %p341
        $region102: #{tpu_custom_call.1} parent=71 // pred_check_branch
          %1816 = sbr.rel (%p1814) target = $region104
        $region103: #{tpu_custom_call.1} parent=71 // pred_region
          %1817 = dma.done [#allocation6], 32
        $region104: #{tpu_custom_call.1} parent=71 // pred_fallthru
          _
      $region72: #{tpu_custom_call.1} parent=5 // pred_fallthru
        _
      %p1818 = scmp.le.s32.totalorder 2, %s24
      // Predicated region
      $region105: #{tpu_custom_call.1} parent=5 // pred_check
        %p1819 = pneg %p1818
      $region106: #{tpu_custom_call.1} parent=5 // pred_check_branch
        %1821 = sbr.rel (%p1819) target = $region108
      $region107: #{tpu_custom_call.1} parent=5 // pred_region
        %s1822 = ssub.s32 %s24, 2
      $region108: #{tpu_custom_call.1} parent=5 // pred_fallthru
        _
    $region6: #{tpu_custom_call.1} parent=1 // loop_footer
      %s28 = sadd.s32 1, %s24
    $region7: #{tpu_custom_call.1} parent=1 // loop_footer_branch
      %23 = sbr.rel target = $region3
    $region8: #{tpu_custom_call.1} parent=1 // loop_exit
      _
    %1823 = vsyncpa [#allocation5], 1
    %s1824 = scalar_lea.sflag [#allocation5], 1
    %1825 = vsyncpa %s1824, 1
    %1826 = vsyncpa [#allocation8], 1
    %1827 = vsyncpa [#allocation6], 1
    %s1828 = scalar_lea.sflag [#allocation6], 1
    %1829 = vsyncpa %s1828, 1

</llo_original>
